<compile_context>
chip_gen: v5e
topology: v5e:2x2
jax: 0.10.0
libtpu: 0.0.40
codegen_flags: <defaults>
</compile_context>

<pallas_src>
import functools

import jax
import jax.numpy as jnp
from jax import lax
from jax.experimental import pallas as pl
from jax.experimental.pallas import tpu as pltpu


# ----------------------------- kernel -------------------------------------


def _layer_norm(x, gamma, beta, eps=1e-5):
    # PyTorch nn.LayerNorm semantics: biased variance, eps inside rsqrt.
    mean = jnp.mean(x, axis=-1, keepdims=True)
    var = jnp.mean((x - mean) ** 2, axis=-1, keepdims=True)
    return (x - mean) * lax.rsqrt(var + eps) * gamma + beta


def encoder_layer_kernel(
    xq_ref, xkv_ref,
    wq_t_ref, bq_ref, wk_t_ref, bk_ref, wv_t_ref, bv_ref, wo_t_ref, bo_ref,
    ln1_g_ref, ln1_b_ref,
    w1_t_ref, b1_ref, w2_t_ref, b2_ref,
    ln2_g_ref, ln2_b_ref,
    o_ref,
    k_scr, v_scr,
    *, num_heads, ffn_chunk, mm_dtype,
):
    qi = pl.program_id(1)

    E = xq_ref.shape[-1]
    D = E // num_heads
    F = w1_t_ref.shape[-1]
    scale = 1.0 / (D ** 0.5)          # fairseq scales q (post-bias) by head_dim**-0.5

    # ---- K / V projection for the full sequence: once per batch element ----
    @pl.when(qi == 0)
    def _():
        xkv = xkv_ref[0].astype(mm_dtype)                       # (T, E)
        k = jnp.dot(xkv, wk_t_ref[...],
                    preferred_element_type=jnp.float32) + bk_ref[0]
        v = jnp.dot(xkv, wv_t_ref[...],
                    preferred_element_type=jnp.float32) + bv_ref[0]
        k_scr[...] = k.astype(k_scr.dtype)
        v_scr[...] = v.astype(v_scr.dtype)

    x = xq_ref[0]                                               # (TQ, E) f32 residual
    x_mm = x.astype(mm_dtype)

    # ---- self-attention --------------------------------------------------
    q = (jnp.dot(x_mm, wq_t_ref[...],
                 preferred_element_type=jnp.float32) + bq_ref[0]) * scale
    q_mm = q.astype(mm_dtype)
    k = k_scr[...]
    v = v_scr[...]

    attn = jnp.zeros((x.shape[0], E), jnp.float32)
    for h in range(num_heads):        # static unroll over heads (static slices)
        qh = q_mm[:, h * D:(h + 1) * D]                         # (TQ, D)
        kh = k[:, h * D:(h + 1) * D]                            # (T,  D)
        vh = v[:, h * D:(h + 1) * D]                            # (T,  D)
        # QK^T with K contracted on its last dim (no materialized transpose).
        s = lax.dot_general(qh, kh, (((1,), (1,)), ((), ())),
                            preferred_element_type=jnp.float32)  # (TQ, T)
        s = s - jnp.max(s, axis=-1, keepdims=True)
        p = jnp.exp(s)
        p = p * pl.reciprocal(jnp.sum(p, axis=-1, keepdims=True), approx=True)
        oh = jnp.dot(p.astype(mm_dtype), vh,
                     preferred_element_type=jnp.float32)         # (TQ, D)
        # Fold the output projection into the head loop (no concatenate).
        attn = attn + jnp.dot(oh.astype(mm_dtype),
                              wo_t_ref[h * D:(h + 1) * D, :],
                              preferred_element_type=jnp.float32)
    attn = attn + bo_ref[0]

    # ---- residual + self_attn_layer_norm ----------------------------------
    x1 = _layer_norm(x + attn, ln1_g_ref[0], ln1_b_ref[0])
    x1_mm = x1.astype(mm_dtype)

    # ---- FFN (chunked over hidden dim) ------------------------------------
    h2 = jnp.zeros_like(x1)
    for f0 in range(0, F, ffn_chunk):
        f1 = f0 + ffn_chunk
        h1c = jnp.dot(x1_mm, w1_t_ref[:, f0:f1],
                      preferred_element_type=jnp.float32) + b1_ref[0, f0:f1]
        h1c = jnp.maximum(h1c, 0.0)   # relu activation_fn
        h2 = h2 + jnp.dot(h1c.astype(mm_dtype), w2_t_ref[f0:f1, :],
                          preferred_element_type=jnp.float32)
    h2 = h2 + b2_ref[0]

    # ---- residual + final_layer_norm --------------------------------------
    x2 = _layer_norm(x1 + h2, ln2_g_ref[0], ln2_b_ref[0])
    o_ref[0] = x2.astype(o_ref.dtype)


# ----------------------------- wrapper -------------------------------------


def transformer_encoder_layer(x, params, *, num_heads, weight_dtype=None):
    """x: (B, T, E) float32.  Returns (y, attn=None) like the torch module.

    weight_dtype: dtype for the large weight matrices / matmul operands
    (e.g. jnp.bfloat16).  Accumulation is always f32; biases, softmax,
    LayerNorm and residuals stay f32.
    """
    B, T, E = x.shape
    F = params["w1"].shape[0]
    assert E % num_heads == 0

    mm_dtype = jnp.dtype(x.dtype if weight_dtype is None else weight_dtype)

    # Query-tile size (must divide T; real models use T multiple of 128).
    tq = 128 if (T % 128 == 0) else T
    # FFN hidden-dim chunk (must divide F).
    fc = 512 if (F % 512 == 0) else F

    cast_w = lambda w: w.astype(mm_dtype)
    row = lambda v: v.reshape(1, -1).astype(jnp.float32)

    # Pre-transpose weights once here (outside the kernel) -> nn.Linear
    # y = x @ W.T + b becomes y = x @ W_t + b with no in-kernel transpose.
    wq_t = cast_w(params["wq"].T)
    wk_t = cast_w(params["wk"].T)
    wv_t = cast_w(params["wv"].T)
    wo_t = cast_w(params["wo"].T)
    w1_t = cast_w(params["w1"].T)     # (E, F)
    w2_t = cast_w(params["w2"].T)     # (F, E)

    full2d = lambda shape: pl.BlockSpec(shape, lambda b, q: (0, 0))

    in_specs = [
        pl.BlockSpec((1, tq, E), lambda b, q: (b, q, 0)),    # x (query tile)
        pl.BlockSpec((1, T, E), lambda b, q: (b, 0, 0)),     # x (full seq for K/V)
        full2d((E, E)), full2d((1, E)),                      # Wq^T, bq
        full2d((E, E)), full2d((1, E)),                      # Wk^T, bk
        full2d((E, E)), full2d((1, E)),                      # Wv^T, bv
        full2d((E, E)), full2d((1, E)),                      # Wo^T, bo
        full2d((1, E)), full2d((1, E)),                      # ln1 gamma, beta
        full2d((E, F)), full2d((1, F)),                      # fc1 W^T, b
        full2d((F, E)), full2d((1, E)),                      # fc2 W^T, b
        full2d((1, E)), full2d((1, E)),                      # ln2 gamma, beta
    ]

    out = pl.pallas_call(
        functools.partial(encoder_layer_kernel, num_heads=num_heads,
                          ffn_chunk=fc, mm_dtype=mm_dtype),
        out_shape=jax.ShapeDtypeStruct((B, T, E), x.dtype),
        grid_spec=pltpu.PrefetchScalarGridSpec(
            num_scalar_prefetch=0,
            grid=(B, T // tq),
            in_specs=in_specs,
            out_specs=pl.BlockSpec((1, tq, E), lambda b, q: (b, q, 0)),
            scratch_shapes=[
                pltpu.VMEM((T, E), mm_dtype),   # K cache (full sequence)
                pltpu.VMEM((T, E), mm_dtype),   # V cache (full sequence)
            ],
        ),
        compiler_params=pltpu.CompilerParams(
            dimension_semantics=("parallel", "arbitrary"),
            vmem_limit_bytes=48 * 1024 * 1024,
        ),
    )(
        x, x,
        wq_t, row(params["bq"]),
        wk_t, row(params["bk"]),
        wv_t, row(params["bv"]),
        wo_t, row(params["bo"]),
        row(params["ln1_g"]), row(params["ln1_b"]),
        w1_t, row(params["b1"]),
        w2_t, row(params["b2"]),
        row(params["ln2_g"]), row(params["ln2_b"]),
    )
    # need_weights=False in the reference => attn is None
    return out, None


# ----------------------------- reference (plain JAX) ------------------------


def reference(x, params, *, num_heads):
    B, T, E = x.shape
    D = E // num_heads
    scale = 1.0 / (D ** 0.5)

    def ln(v, g, b, eps=1e-5):
        m = jnp.mean(v, -1, keepdims=True)
        va = jnp.mean((v - m) ** 2, -1, keepdims=True)
        return (v - m) * lax.rsqrt(va + eps) * g + b

    q = (x @ params["wq"].T + params["bq"]) * scale
    k = x @ params["wk"].T + params["bk"]
    v = x @ params["wv"].T + params["bv"]
    q = q.reshape(B, T, num_heads, D).transpose(0, 2, 1, 3)
    k = k.reshape(B, T, num_heads, D).transpose(0, 2, 1, 3)
    v = v.reshape(B, T, num_heads, D).transpose(0, 2, 1, 3)
    s = jnp.einsum("bhtd,bhsd->bhts", q, k)
    p = jax.nn.softmax(s, axis=-1)
    a = jnp.einsum("bhts,bhsd->bhtd", p, v).transpose(0, 2, 1, 3).reshape(B, T, E)
    a = a @ params["wo"].T + params["bo"]
    x1 = ln(x + a, params["ln1_g"], params["ln1_b"])
    h = jnp.maximum(x1 @ params["w1"].T + params["b1"], 0.0)
    h = h @ params["w2"].T + params["b2"]
    return ln(x1 + h, params["ln2_g"], params["ln2_b"])


# ----------------------------- main -----------------------------------------


if __name__ == "__main__":
    B, T, E, H, FFN = 2, 16, 32, 4, 64

    key = jax.random.PRNGKey(0)
    keys = jax.random.split(key, 16)

    def w(k, shape, scale=0.05):
        return (scale * jax.random.normal(k, shape)).astype(jnp.float32)

    params = {
        "wq": w(keys[0], (E, E)), "bq": w(keys[1], (E,)),
        "wk": w(keys[2], (E, E)), "bk": w(keys[3], (E,)),
        "wv": w(keys[4], (E, E)), "bv": w(keys[5], (E,)),
        "wo": w(keys[6], (E, E)), "bo": w(keys[7], (E,)),
        "ln1_g": jnp.ones((E,), jnp.float32), "ln1_b": jnp.zeros((E,), jnp.float32),
        "w1": w(keys[8], (FFN, E)), "b1": w(keys[9], (FFN,)),
        "w2": w(keys[10], (E, FFN)), "b2": w(keys[11], (E,)),
        "ln2_g": jnp.ones((E,), jnp.float32), "ln2_b": jnp.zeros((E,), jnp.float32),
    }

    x = jax.random.normal(keys[12], (B, T, E), dtype=jnp.float32)

    y_ref = reference(x, params, num_heads=H)

    # f32 operands (tolerance covers the approx reciprocal in the softmax).
    y, attn = transformer_encoder_layer(x, params, num_heads=H)
    y = jax.block_until_ready(y)
    assert jnp.allclose(y, y_ref, atol=5e-3, rtol=5e-3), "f32 mismatch vs reference"

    # bf16 matmul operands, f32 accumulation (perf path on v5e/v6e/v7x).
    y_bf, _ = transformer_encoder_layer(x, params, num_heads=H,
                                        weight_dtype=jnp.bfloat16)
    y_bf = jax.block_until_ready(y_bf)
    assert jnp.allclose(y_bf, y_ref, atol=5e-2, rtol=5e-2), "bf16 mismatch vs reference"

    # TODO(synk): dropout layers are identity (eval mode); key_padding_mask /
    # attn_mask arguments are None in this synthetic setup and not modeled.
    print("KERNEL_OK")
</pallas_src>

<mosaic_0001>
module attributes {stable_mosaic.version = 11 : i64} {
  func.func @encoder_layer_kernel(%arg0: i32, %arg1: i32, %arg2: memref<1x16x32xf32, #tpu.memory_space<vmem>>, %arg3: memref<1x16x32xf32, #tpu.memory_space<vmem>>, %arg4: memref<32x32xf32, #tpu.memory_space<vmem>>, %arg5: memref<1x32xf32, #tpu.memory_space<vmem>>, %arg6: memref<32x32xf32, #tpu.memory_space<vmem>>, %arg7: memref<1x32xf32, #tpu.memory_space<vmem>>, %arg8: memref<32x32xf32, #tpu.memory_space<vmem>>, %arg9: memref<1x32xf32, #tpu.memory_space<vmem>>, %arg10: memref<32x32xf32, #tpu.memory_space<vmem>>, %arg11: memref<1x32xf32, #tpu.memory_space<vmem>>, %arg12: memref<1x32xf32, #tpu.memory_space<vmem>>, %arg13: memref<1x32xf32, #tpu.memory_space<vmem>>, %arg14: memref<32x64xf32, #tpu.memory_space<vmem>>, %arg15: memref<1x64xf32, #tpu.memory_space<vmem>>, %arg16: memref<64x32xf32, #tpu.memory_space<vmem>>, %arg17: memref<1x32xf32, #tpu.memory_space<vmem>>, %arg18: memref<1x32xf32, #tpu.memory_space<vmem>>, %arg19: memref<1x32xf32, #tpu.memory_space<vmem>>, %arg20: memref<1x16x32xf32, #tpu.memory_space<vmem>>, %arg21: memref<16x32xf32, #tpu.memory_space<vmem>>, %arg22: memref<16x32xf32, #tpu.memory_space<vmem>>) attributes {dimension_semantics = [#tpu.dimension_semantics<parallel>, #tpu.dimension_semantics<arbitrary>], iteration_bounds = array<i64: 2, 1>, scalar_prefetch = 0 : i64, scratch_operands = 2 : i64, tpu.core_type = #tpu.core_type<tc>, window_params = [{transform_indices = @transform_0, window_bounds = array<i64: 1, 16, 32>}, {transform_indices = @transform_1, window_bounds = array<i64: 1, 16, 32>}, {pipeline_mode = #tpu.pipeline_mode<synchronous>, transform_indices = @transform_2, window_bounds = array<i64: 32, 32>}, {pipeline_mode = #tpu.pipeline_mode<synchronous>, transform_indices = @transform_3, window_bounds = array<i64: 1, 32>}, {pipeline_mode = #tpu.pipeline_mode<synchronous>, transform_indices = @transform_4, window_bounds = array<i64: 32, 32>}, {pipeline_mode = #tpu.pipeline_mode<synchronous>, transform_indices = @transform_5, window_bounds = array<i64: 1, 32>}, {pipeline_mode = #tpu.pipeline_mode<synchronous>, transform_indices = @transform_6, window_bounds = array<i64: 32, 32>}, {pipeline_mode = #tpu.pipeline_mode<synchronous>, transform_indices = @transform_7, window_bounds = array<i64: 1, 32>}, {pipeline_mode = #tpu.pipeline_mode<synchronous>, transform_indices = @transform_8, window_bounds = array<i64: 32, 32>}, {pipeline_mode = #tpu.pipeline_mode<synchronous>, transform_indices = @transform_9, window_bounds = array<i64: 1, 32>}, {pipeline_mode = #tpu.pipeline_mode<synchronous>, transform_indices = @transform_10, window_bounds = array<i64: 1, 32>}, {pipeline_mode = #tpu.pipeline_mode<synchronous>, transform_indices = @transform_11, window_bounds = array<i64: 1, 32>}, {pipeline_mode = #tpu.pipeline_mode<synchronous>, transform_indices = @transform_12, window_bounds = array<i64: 32, 64>}, {pipeline_mode = #tpu.pipeline_mode<synchronous>, transform_indices = @transform_13, window_bounds = array<i64: 1, 64>}, {pipeline_mode = #tpu.pipeline_mode<synchronous>, transform_indices = @transform_14, window_bounds = array<i64: 64, 32>}, {pipeline_mode = #tpu.pipeline_mode<synchronous>, transform_indices = @transform_15, window_bounds = array<i64: 1, 32>}, {pipeline_mode = #tpu.pipeline_mode<synchronous>, transform_indices = @transform_16, window_bounds = array<i64: 1, 32>}, {pipeline_mode = #tpu.pipeline_mode<synchronous>, transform_indices = @transform_17, window_bounds = array<i64: 1, 32>}, {transform_indices = @transform_18, window_bounds = array<i64: 1, 16, 32>}]} {
    %c0_i32 = arith.constant 0 : i32
    %0 = arith.cmpi eq, %arg1, %c0_i32 : i32
    %1 = arith.extui %0 : i1 to i32
    %c0_i32_0 = arith.constant 0 : i32
    %2 = arith.cmpi ne, %1, %c0_i32_0 : i32
    scf.if %2 {
      %c0_73 = arith.constant 0 : index
      %c0_74 = arith.constant 0 : index
      %c0_75 = arith.constant 0 : index
      %173 = vector.load %arg3[%c0_73, %c0_74, %c0_75] : memref<1x16x32xf32, #tpu.memory_space<vmem>>, vector<1x16x32xf32>
      %174 = vector.shape_cast %173 : vector<1x16x32xf32> to vector<16x32xf32>
      %c0_76 = arith.constant 0 : index
      %c0_77 = arith.constant 0 : index
      %175 = vector.load %arg6[%c0_76, %c0_77] : memref<32x32xf32, #tpu.memory_space<vmem>>, vector<32x32xf32>
      %cst_78 = arith.constant dense<0.000000e+00> : vector<16x32xf32>
      %176 = tpu.matmul %174, %175, %cst_78 {dimension_numbers = #tpu.dot_dimension_numbers<[1], [0], [0], [1], [0, 0, 1, 1], [], []>} : vector<16x32xf32>, vector<32x32xf32>, vector<16x32xf32> -> vector<16x32xf32>
      %c0_79 = arith.constant 0 : index
      %c0_80 = arith.constant 0 : index
      %177 = vector.load %arg7[%c0_79, %c0_80] : memref<1x32xf32, #tpu.memory_space<vmem>>, vector<1x32xf32>
      %178 = vector.shape_cast %177 : vector<1x32xf32> to vector<32xf32>
      %179 = vector.shape_cast %178 : vector<32xf32> to vector<1x32xf32>
      %180 = vector.broadcast %179 : vector<1x32xf32> to vector<16x32xf32>
      %181 = arith.addf %176, %180 : vector<16x32xf32>
      %c0_81 = arith.constant 0 : index
      %c0_82 = arith.constant 0 : index
      %182 = vector.load %arg8[%c0_81, %c0_82] : memref<32x32xf32, #tpu.memory_space<vmem>>, vector<32x32xf32>
      %cst_83 = arith.constant dense<0.000000e+00> : vector<16x32xf32>
      %183 = tpu.matmul %174, %182, %cst_83 {dimension_numbers = #tpu.dot_dimension_numbers<[1], [0], [0], [1], [0, 0, 1, 1], [], []>} : vector<16x32xf32>, vector<32x32xf32>, vector<16x32xf32> -> vector<16x32xf32>
      %c0_84 = arith.constant 0 : index
      %c0_85 = arith.constant 0 : index
      %184 = vector.load %arg9[%c0_84, %c0_85] : memref<1x32xf32, #tpu.memory_space<vmem>>, vector<1x32xf32>
      %185 = vector.shape_cast %184 : vector<1x32xf32> to vector<32xf32>
      %186 = vector.shape_cast %185 : vector<32xf32> to vector<1x32xf32>
      %187 = vector.broadcast %186 : vector<1x32xf32> to vector<16x32xf32>
      %188 = arith.addf %183, %187 : vector<16x32xf32>
      %c0_86 = arith.constant 0 : index
      %c0_87 = arith.constant 0 : index
      %189 = vector.load %arg21[%c0_86, %c0_87] : memref<16x32xf32, #tpu.memory_space<vmem>>, vector<16x32xf32>
      tpu.vector_store %arg21[%c0_86, %c0_87], %181 {strides = array<i32>} : memref<16x32xf32, #tpu.memory_space<vmem>>, vector<16x32xf32>,
      %c0_88 = arith.constant 0 : index
      %c0_89 = arith.constant 0 : index
      %190 = vector.load %arg22[%c0_88, %c0_89] : memref<16x32xf32, #tpu.memory_space<vmem>>, vector<16x32xf32>
      tpu.vector_store %arg22[%c0_88, %c0_89], %188 {strides = array<i32>} : memref<16x32xf32, #tpu.memory_space<vmem>>, vector<16x32xf32>,
    } else {
    }
    %c0 = arith.constant 0 : index
    %c0_1 = arith.constant 0 : index
    %c0_2 = arith.constant 0 : index
    %3 = vector.load %arg2[%c0, %c0_1, %c0_2] : memref<1x16x32xf32, #tpu.memory_space<vmem>>, vector<1x16x32xf32>
    %4 = vector.shape_cast %3 : vector<1x16x32xf32> to vector<16x32xf32>
    %c0_3 = arith.constant 0 : index
    %c0_4 = arith.constant 0 : index
    %5 = vector.load %arg4[%c0_3, %c0_4] : memref<32x32xf32, #tpu.memory_space<vmem>>, vector<32x32xf32>
    %cst = arith.constant dense<0.000000e+00> : vector<16x32xf32>
    %6 = tpu.matmul %4, %5, %cst {dimension_numbers = #tpu.dot_dimension_numbers<[1], [0], [0], [1], [0, 0, 1, 1], [], []>} : vector<16x32xf32>, vector<32x32xf32>, vector<16x32xf32> -> vector<16x32xf32>
    %c0_5 = arith.constant 0 : index
    %c0_6 = arith.constant 0 : index
    %7 = vector.load %arg5[%c0_5, %c0_6] : memref<1x32xf32, #tpu.memory_space<vmem>>, vector<1x32xf32>
    %8 = vector.shape_cast %7 : vector<1x32xf32> to vector<32xf32>
    %9 = vector.shape_cast %8 : vector<32xf32> to vector<1x32xf32>
    %10 = vector.broadcast %9 : vector<1x32xf32> to vector<16x32xf32>
    %11 = arith.addf %6, %10 : vector<16x32xf32>
    %cst_7 = arith.constant 0.353553385 : f32
    %12 = vector.broadcast %cst_7 : f32 to vector<16x32xf32>
    %13 = arith.mulf %11, %12 : vector<16x32xf32>
    %c0_8 = arith.constant 0 : index
    %c0_9 = arith.constant 0 : index
    %14 = vector.load %arg21[%c0_8, %c0_9] : memref<16x32xf32, #tpu.memory_space<vmem>>, vector<16x32xf32>
    %c0_10 = arith.constant 0 : index
    %c0_11 = arith.constant 0 : index
    %15 = vector.load %arg22[%c0_10, %c0_11] : memref<16x32xf32, #tpu.memory_space<vmem>>, vector<16x32xf32>
    %cst_12 = arith.constant 0.000000e+00 : f32
    %16 = vector.broadcast %cst_12 : f32 to vector<16x32xf32>
    %17 = vector.extract_strided_slice %13 {offsets = [0, 0], sizes = [16, 8], strides = [1, 1]} : vector<16x32xf32> to vector<16x8xf32>
    %18 = vector.extract_strided_slice %14 {offsets = [0, 0], sizes = [16, 8], strides = [1, 1]} : vector<16x32xf32> to vector<16x8xf32>
    %19 = vector.extract_strided_slice %15 {offsets = [0, 0], sizes = [16, 8], strides = [1, 1]} : vector<16x32xf32> to vector<16x8xf32>
    %cst_13 = arith.constant dense<0.000000e+00> : vector<16x16xf32>
    %20 = tpu.matmul %17, %18, %cst_13 {dimension_numbers = #tpu.dot_dimension_numbers<[1], [1], [0], [0], [0, 0, 1, 0], [], []>} : vector<16x8xf32>, vector<16x8xf32>, vector<16x16xf32> -> vector<16x16xf32>
    %cst_14 = arith.constant dense<0xFF800000> : vector<16xf32>
    %21 = vector.multi_reduction <maximumf>, %20, %cst_14 [1] : vector<16x16xf32> to vector<16xf32>
    %22 = vector.shape_cast %21 : vector<16xf32> to vector<16x1xf32>
    %23 = vector.broadcast %22 : vector<16x1xf32> to vector<16x16xf32>
    %24 = arith.subf %20, %23 : vector<16x16xf32>
    %25 = math.exp %24 : vector<16x16xf32>
    %cst_15 = arith.constant dense<0.000000e+00> : vector<16xf32>
    %26 = vector.multi_reduction <add>, %25, %cst_15 [1] : vector<16x16xf32> to vector<16xf32>
    %27 = vector.shape_cast %26 : vector<16xf32> to vector<16x1xf32>
    %28 = tpu.reciprocal %27 {approx = true} : vector<16x1xf32> -> vector<16x1xf32>
    %29 = vector.broadcast %28 : vector<16x1xf32> to vector<16x16xf32>
    %30 = arith.mulf %25, %29 : vector<16x16xf32>
    %cst_16 = arith.constant dense<0.000000e+00> : vector<16x8xf32>
    %31 = tpu.matmul %30, %19, %cst_16 {dimension_numbers = #tpu.dot_dimension_numbers<[1], [0], [0], [1], [0, 0, 1, 1], [], []>} : vector<16x16xf32>, vector<16x8xf32>, vector<16x8xf32> -> vector<16x8xf32>
    %c0_17 = arith.constant 0 : index
    %c0_18 = arith.constant 0 : index
    %32 = vector.load %arg10[%c0_17, %c0_18] : memref<32x32xf32, #tpu.memory_space<vmem>>, vector<8x32xf32>
    %cst_19 = arith.constant dense<0.000000e+00> : vector<16x32xf32>
    %33 = tpu.matmul %31, %32, %cst_19 {dimension_numbers = #tpu.dot_dimension_numbers<[1], [0], [0], [1], [0, 0, 1, 1], [], []>} : vector<16x8xf32>, vector<8x32xf32>, vector<16x32xf32> -> vector<16x32xf32>
    %34 = arith.addf %16, %33 : vector<16x32xf32>
    %35 = vector.extract_strided_slice %13 {offsets = [0, 8], sizes = [16, 8], strides = [1, 1]} : vector<16x32xf32> to vector<16x8xf32>
    %36 = vector.extract_strided_slice %14 {offsets = [0, 8], sizes = [16, 8], strides = [1, 1]} : vector<16x32xf32> to vector<16x8xf32>
    %37 = vector.extract_strided_slice %15 {offsets = [0, 8], sizes = [16, 8], strides = [1, 1]} : vector<16x32xf32> to vector<16x8xf32>
    %cst_20 = arith.constant dense<0.000000e+00> : vector<16x16xf32>
    %38 = tpu.matmul %35, %36, %cst_20 {dimension_numbers = #tpu.dot_dimension_numbers<[1], [1], [0], [0], [0, 0, 1, 0], [], []>} : vector<16x8xf32>, vector<16x8xf32>, vector<16x16xf32> -> vector<16x16xf32>
    %cst_21 = arith.constant dense<0xFF800000> : vector<16xf32>
    %39 = vector.multi_reduction <maximumf>, %38, %cst_21 [1] : vector<16x16xf32> to vector<16xf32>
    %40 = vector.shape_cast %39 : vector<16xf32> to vector<16x1xf32>
    %41 = vector.broadcast %40 : vector<16x1xf32> to vector<16x16xf32>
    %42 = arith.subf %38, %41 : vector<16x16xf32>
    %43 = math.exp %42 : vector<16x16xf32>
    %cst_22 = arith.constant dense<0.000000e+00> : vector<16xf32>
    %44 = vector.multi_reduction <add>, %43, %cst_22 [1] : vector<16x16xf32> to vector<16xf32>
    %45 = vector.shape_cast %44 : vector<16xf32> to vector<16x1xf32>
    %46 = tpu.reciprocal %45 {approx = true} : vector<16x1xf32> -> vector<16x1xf32>
    %47 = vector.broadcast %46 : vector<16x1xf32> to vector<16x16xf32>
    %48 = arith.mulf %43, %47 : vector<16x16xf32>
    %cst_23 = arith.constant dense<0.000000e+00> : vector<16x8xf32>
    %49 = tpu.matmul %48, %37, %cst_23 {dimension_numbers = #tpu.dot_dimension_numbers<[1], [0], [0], [1], [0, 0, 1, 1], [], []>} : vector<16x16xf32>, vector<16x8xf32>, vector<16x8xf32> -> vector<16x8xf32>
    %c8 = arith.constant 8 : index
    %c0_24 = arith.constant 0 : index
    %50 = vector.load %arg10[%c8, %c0_24] : memref<32x32xf32, #tpu.memory_space<vmem>>, vector<8x32xf32>
    %cst_25 = arith.constant dense<0.000000e+00> : vector<16x32xf32>
    %51 = tpu.matmul %49, %50, %cst_25 {dimension_numbers = #tpu.dot_dimension_numbers<[1], [0], [0], [1], [0, 0, 1, 1], [], []>} : vector<16x8xf32>, vector<8x32xf32>, vector<16x32xf32> -> vector<16x32xf32>
    %52 = arith.addf %34, %51 : vector<16x32xf32>
    %53 = vector.extract_strided_slice %13 {offsets = [0, 16], sizes = [16, 8], strides = [1, 1]} : vector<16x32xf32> to vector<16x8xf32>
    %54 = vector.extract_strided_slice %14 {offsets = [0, 16], sizes = [16, 8], strides = [1, 1]} : vector<16x32xf32> to vector<16x8xf32>
    %55 = vector.extract_strided_slice %15 {offsets = [0, 16], sizes = [16, 8], strides = [1, 1]} : vector<16x32xf32> to vector<16x8xf32>
    %cst_26 = arith.constant dense<0.000000e+00> : vector<16x16xf32>
    %56 = tpu.matmul %53, %54, %cst_26 {dimension_numbers = #tpu.dot_dimension_numbers<[1], [1], [0], [0], [0, 0, 1, 0], [], []>} : vector<16x8xf32>, vector<16x8xf32>, vector<16x16xf32> -> vector<16x16xf32>
    %cst_27 = arith.constant dense<0xFF800000> : vector<16xf32>
    %57 = vector.multi_reduction <maximumf>, %56, %cst_27 [1] : vector<16x16xf32> to vector<16xf32>
    %58 = vector.shape_cast %57 : vector<16xf32> to vector<16x1xf32>
    %59 = vector.broadcast %58 : vector<16x1xf32> to vector<16x16xf32>
    %60 = arith.subf %56, %59 : vector<16x16xf32>
    %61 = math.exp %60 : vector<16x16xf32>
    %cst_28 = arith.constant dense<0.000000e+00> : vector<16xf32>
    %62 = vector.multi_reduction <add>, %61, %cst_28 [1] : vector<16x16xf32> to vector<16xf32>
    %63 = vector.shape_cast %62 : vector<16xf32> to vector<16x1xf32>
    %64 = tpu.reciprocal %63 {approx = true} : vector<16x1xf32> -> vector<16x1xf32>
    %65 = vector.broadcast %64 : vector<16x1xf32> to vector<16x16xf32>
    %66 = arith.mulf %61, %65 : vector<16x16xf32>
    %cst_29 = arith.constant dense<0.000000e+00> : vector<16x8xf32>
    %67 = tpu.matmul %66, %55, %cst_29 {dimension_numbers = #tpu.dot_dimension_numbers<[1], [0], [0], [1], [0, 0, 1, 1], [], []>} : vector<16x16xf32>, vector<16x8xf32>, vector<16x8xf32> -> vector<16x8xf32>
    %c16 = arith.constant 16 : index
    %c0_30 = arith.constant 0 : index
    %68 = vector.load %arg10[%c16, %c0_30] : memref<32x32xf32, #tpu.memory_space<vmem>>, vector<8x32xf32>
    %cst_31 = arith.constant dense<0.000000e+00> : vector<16x32xf32>
    %69 = tpu.matmul %67, %68, %cst_31 {dimension_numbers = #tpu.dot_dimension_numbers<[1], [0], [0], [1], [0, 0, 1, 1], [], []>} : vector<16x8xf32>, vector<8x32xf32>, vector<16x32xf32> -> vector<16x32xf32>
    %70 = arith.addf %52, %69 : vector<16x32xf32>
    %71 = vector.extract_strided_slice %13 {offsets = [0, 24], sizes = [16, 8], strides = [1, 1]} : vector<16x32xf32> to vector<16x8xf32>
    %72 = vector.extract_strided_slice %14 {offsets = [0, 24], sizes = [16, 8], strides = [1, 1]} : vector<16x32xf32> to vector<16x8xf32>
    %73 = vector.extract_strided_slice %15 {offsets = [0, 24], sizes = [16, 8], strides = [1, 1]} : vector<16x32xf32> to vector<16x8xf32>
    %cst_32 = arith.constant dense<0.000000e+00> : vector<16x16xf32>
    %74 = tpu.matmul %71, %72, %cst_32 {dimension_numbers = #tpu.dot_dimension_numbers<[1], [1], [0], [0], [0, 0, 1, 0], [], []>} : vector<16x8xf32>, vector<16x8xf32>, vector<16x16xf32> -> vector<16x16xf32>
    %cst_33 = arith.constant dense<0xFF800000> : vector<16xf32>
    %75 = vector.multi_reduction <maximumf>, %74, %cst_33 [1] : vector<16x16xf32> to vector<16xf32>
    %76 = vector.shape_cast %75 : vector<16xf32> to vector<16x1xf32>
    %77 = vector.broadcast %76 : vector<16x1xf32> to vector<16x16xf32>
    %78 = arith.subf %74, %77 : vector<16x16xf32>
    %79 = math.exp %78 : vector<16x16xf32>
    %cst_34 = arith.constant dense<0.000000e+00> : vector<16xf32>
    %80 = vector.multi_reduction <add>, %79, %cst_34 [1] : vector<16x16xf32> to vector<16xf32>
    %81 = vector.shape_cast %80 : vector<16xf32> to vector<16x1xf32>
    %82 = tpu.reciprocal %81 {approx = true} : vector<16x1xf32> -> vector<16x1xf32>
    %83 = vector.broadcast %82 : vector<16x1xf32> to vector<16x16xf32>
    %84 = arith.mulf %79, %83 : vector<16x16xf32>
    %cst_35 = arith.constant dense<0.000000e+00> : vector<16x8xf32>
    %85 = tpu.matmul %84, %73, %cst_35 {dimension_numbers = #tpu.dot_dimension_numbers<[1], [0], [0], [1], [0, 0, 1, 1], [], []>} : vector<16x16xf32>, vector<16x8xf32>, vector<16x8xf32> -> vector<16x8xf32>
    %c24 = arith.constant 24 : index
    %c0_36 = arith.constant 0 : index
    %86 = vector.load %arg10[%c24, %c0_36] : memref<32x32xf32, #tpu.memory_space<vmem>>, vector<8x32xf32>
    %cst_37 = arith.constant dense<0.000000e+00> : vector<16x32xf32>
    %87 = tpu.matmul %85, %86, %cst_37 {dimension_numbers = #tpu.dot_dimension_numbers<[1], [0], [0], [1], [0, 0, 1, 1], [], []>} : vector<16x8xf32>, vector<8x32xf32>, vector<16x32xf32> -> vector<16x32xf32>
    %88 = arith.addf %70, %87 : vector<16x32xf32>
    %c0_38 = arith.constant 0 : index
    %c0_39 = arith.constant 0 : index
    %89 = vector.load %arg11[%c0_38, %c0_39] : memref<1x32xf32, #tpu.memory_space<vmem>>, vector<1x32xf32>
    %90 = vector.shape_cast %89 : vector<1x32xf32> to vector<32xf32>
    %91 = vector.shape_cast %90 : vector<32xf32> to vector<1x32xf32>
    %92 = vector.broadcast %91 : vector<1x32xf32> to vector<16x32xf32>
    %93 = arith.addf %88, %92 : vector<16x32xf32>
    %94 = arith.addf %4, %93 : vector<16x32xf32>
    %c0_40 = arith.constant 0 : index
    %c0_41 = arith.constant 0 : index
    %95 = vector.load %arg12[%c0_40, %c0_41] : memref<1x32xf32, #tpu.memory_space<vmem>>, vector<1x32xf32>
    %96 = vector.shape_cast %95 : vector<1x32xf32> to vector<32xf32>
    %c0_42 = arith.constant 0 : index
    %c0_43 = arith.constant 0 : index
    %97 = vector.load %arg13[%c0_42, %c0_43] : memref<1x32xf32, #tpu.memory_space<vmem>>, vector<1x32xf32>
    %98 = vector.shape_cast %97 : vector<1x32xf32> to vector<32xf32>
    %cst_44 = arith.constant dense<0.000000e+00> : vector<16xf32>
    %99 = vector.multi_reduction <add>, %94, %cst_44 [1] : vector<16x32xf32> to vector<16xf32>
    %100 = vector.shape_cast %99 : vector<16xf32> to vector<16x1xf32>
    %cst_45 = arith.constant 3.200000e+01 : f32
    %101 = vector.broadcast %cst_45 : f32 to vector<16x1xf32>
    %102 = arith.divf %100, %101 : vector<16x1xf32>
    %103 = vector.broadcast %102 : vector<16x1xf32> to vector<16x32xf32>
    %104 = arith.subf %94, %103 : vector<16x32xf32>
    %105 = arith.mulf %104, %104 : vector<16x32xf32>
    %cst_46 = arith.constant dense<0.000000e+00> : vector<16xf32>
    %106 = vector.multi_reduction <add>, %105, %cst_46 [1] : vector<16x32xf32> to vector<16xf32>
    %107 = vector.shape_cast %106 : vector<16xf32> to vector<16x1xf32>
    %cst_47 = arith.constant 3.200000e+01 : f32
    %108 = vector.broadcast %cst_47 : f32 to vector<16x1xf32>
    %109 = arith.divf %107, %108 : vector<16x1xf32>
    %110 = vector.broadcast %102 : vector<16x1xf32> to vector<16x32xf32>
    %111 = arith.subf %94, %110 : vector<16x32xf32>
    %cst_48 = arith.constant 9.99999974E-6 : f32
    %112 = vector.broadcast %cst_48 : f32 to vector<16x1xf32>
    %113 = arith.addf %109, %112 : vector<16x1xf32>
    %114 = math.rsqrt %113 : vector<16x1xf32>
    %115 = vector.broadcast %114 : vector<16x1xf32> to vector<16x32xf32>
    %116 = arith.mulf %111, %115 : vector<16x32xf32>
    %117 = vector.shape_cast %96 : vector<32xf32> to vector<1x32xf32>
    %118 = vector.broadcast %117 : vector<1x32xf32> to vector<16x32xf32>
    %119 = arith.mulf %116, %118 : vector<16x32xf32>
    %120 = vector.shape_cast %98 : vector<32xf32> to vector<1x32xf32>
    %121 = vector.broadcast %120 : vector<1x32xf32> to vector<16x32xf32>
    %122 = arith.addf %119, %121 : vector<16x32xf32>
    %cst_49 = arith.constant 0.000000e+00 : f32
    %123 = vector.broadcast %cst_49 : f32 to vector<16x32xf32>
    %c0_50 = arith.constant 0 : index
    %c0_51 = arith.constant 0 : index
    %124 = vector.load %arg14[%c0_50, %c0_51] : memref<32x64xf32, #tpu.memory_space<vmem>>, vector<32x64xf32>
    %cst_52 = arith.constant dense<0.000000e+00> : vector<16x64xf32>
    %125 = tpu.matmul %122, %124, %cst_52 {dimension_numbers = #tpu.dot_dimension_numbers<[1], [0], [0], [1], [0, 0, 1, 1], [], []>} : vector<16x32xf32>, vector<32x64xf32>, vector<16x64xf32> -> vector<16x64xf32>
    %c0_53 = arith.constant 0 : index
    %c0_54 = arith.constant 0 : index
    %126 = vector.load %arg15[%c0_53, %c0_54] : memref<1x64xf32, #tpu.memory_space<vmem>>, vector<1x64xf32>
    %127 = vector.shape_cast %126 : vector<1x64xf32> to vector<64xf32>
    %128 = vector.shape_cast %127 : vector<64xf32> to vector<1x64xf32>
    %129 = vector.broadcast %128 : vector<1x64xf32> to vector<16x64xf32>
    %130 = arith.addf %125, %129 : vector<16x64xf32>
    %cst_55 = arith.constant 0.000000e+00 : f32
    %131 = vector.broadcast %cst_55 : f32 to vector<16x64xf32>
    %132 = arith.maximumf %130, %131 : vector<16x64xf32>
    %c0_56 = arith.constant 0 : index
    %c0_57 = arith.constant 0 : index
    %133 = vector.load %arg16[%c0_56, %c0_57] : memref<64x32xf32, #tpu.memory_space<vmem>>, vector<64x32xf32>
    %cst_58 = arith.constant dense<0.000000e+00> : vector<16x32xf32>
    %134 = tpu.matmul %132, %133, %cst_58 {dimension_numbers = #tpu.dot_dimension_numbers<[1], [0], [0], [1], [0, 0, 1, 1], [], []>} : vector<16x64xf32>, vector<64x32xf32>, vector<16x32xf32> -> vector<16x32xf32>
    %135 = arith.addf %123, %134 : vector<16x32xf32>
    %c0_59 = arith.constant 0 : index
    %c0_60 = arith.constant 0 : index
    %136 = vector.load %arg17[%c0_59, %c0_60] : memref<1x32xf32, #tpu.memory_space<vmem>>, vector<1x32xf32>
    %137 = vector.shape_cast %136 : vector<1x32xf32> to vector<32xf32>
    %138 = vector.shape_cast %137 : vector<32xf32> to vector<1x32xf32>
    %139 = vector.broadcast %138 : vector<1x32xf32> to vector<16x32xf32>
    %140 = arith.addf %135, %139 : vector<16x32xf32>
    %141 = arith.addf %122, %140 : vector<16x32xf32>
    %c0_61 = arith.constant 0 : index
    %c0_62 = arith.constant 0 : index
    %142 = vector.load %arg18[%c0_61, %c0_62] : memref<1x32xf32, #tpu.memory_space<vmem>>, vector<1x32xf32>
    %143 = vector.shape_cast %142 : vector<1x32xf32> to vector<32xf32>
    %c0_63 = arith.constant 0 : index
    %c0_64 = arith.constant 0 : index
    %144 = vector.load %arg19[%c0_63, %c0_64] : memref<1x32xf32, #tpu.memory_space<vmem>>, vector<1x32xf32>
    %145 = vector.shape_cast %144 : vector<1x32xf32> to vector<32xf32>
    %cst_65 = arith.constant dense<0.000000e+00> : vector<16xf32>
    %146 = vector.multi_reduction <add>, %141, %cst_65 [1] : vector<16x32xf32> to vector<16xf32>
    %147 = vector.shape_cast %146 : vector<16xf32> to vector<16x1xf32>
    %cst_66 = arith.constant 3.200000e+01 : f32
    %148 = vector.broadcast %cst_66 : f32 to vector<16x1xf32>
    %149 = arith.divf %147, %148 : vector<16x1xf32>
    %150 = vector.broadcast %149 : vector<16x1xf32> to vector<16x32xf32>
    %151 = arith.subf %141, %150 : vector<16x32xf32>
    %152 = arith.mulf %151, %151 : vector<16x32xf32>
    %cst_67 = arith.constant dense<0.000000e+00> : vector<16xf32>
    %153 = vector.multi_reduction <add>, %152, %cst_67 [1] : vector<16x32xf32> to vector<16xf32>
    %154 = vector.shape_cast %153 : vector<16xf32> to vector<16x1xf32>
    %cst_68 = arith.constant 3.200000e+01 : f32
    %155 = vector.broadcast %cst_68 : f32 to vector<16x1xf32>
    %156 = arith.divf %154, %155 : vector<16x1xf32>
    %157 = vector.broadcast %149 : vector<16x1xf32> to vector<16x32xf32>
    %158 = arith.subf %141, %157 : vector<16x32xf32>
    %cst_69 = arith.constant 9.99999974E-6 : f32
    %159 = vector.broadcast %cst_69 : f32 to vector<16x1xf32>
    %160 = arith.addf %156, %159 : vector<16x1xf32>
    %161 = math.rsqrt %160 : vector<16x1xf32>
    %162 = vector.broadcast %161 : vector<16x1xf32> to vector<16x32xf32>
    %163 = arith.mulf %158, %162 : vector<16x32xf32>
    %164 = vector.shape_cast %143 : vector<32xf32> to vector<1x32xf32>
    %165 = vector.broadcast %164 : vector<1x32xf32> to vector<16x32xf32>
    %166 = arith.mulf %163, %165 : vector<16x32xf32>
    %167 = vector.shape_cast %145 : vector<32xf32> to vector<1x32xf32>
    %168 = vector.broadcast %167 : vector<1x32xf32> to vector<16x32xf32>
    %169 = arith.addf %166, %168 : vector<16x32xf32>
    %c0_70 = arith.constant 0 : index
    %c0_71 = arith.constant 0 : index
    %c0_72 = arith.constant 0 : index
    %170 = vector.load %arg20[%c0_70, %c0_71, %c0_72] : memref<1x16x32xf32, #tpu.memory_space<vmem>>, vector<1x16x32xf32>
    %171 = vector.shape_cast %170 : vector<1x16x32xf32> to vector<16x32xf32>
    %172 = vector.shape_cast %169 : vector<16x32xf32> to vector<1x16x32xf32>
    tpu.vector_store %arg20[%c0_70, %c0_71, %c0_72], %172 {strides = array<i32>} : memref<1x16x32xf32, #tpu.memory_space<vmem>>, vector<1x16x32xf32>,
    return
  }
  func.func @transform_0(%arg0: i32, %arg1: i32) -> (i32, i32, i32) {
    %c0_i32 = arith.constant 0 : i32
    %c0_i32_0 = arith.constant 0 : i32
    return %arg0, %arg1, %c0_i32 : i32, i32, i32
  }
  func.func @transform_1(%arg0: i32, %arg1: i32) -> (i32, i32, i32) {
    %c0_i32 = arith.constant 0 : i32
    %c0_i32_0 = arith.constant 0 : i32
    %c0_i32_1 = arith.constant 0 : i32
    return %arg0, %c0_i32, %c0_i32_0 : i32, i32, i32
  }
  func.func @transform_2(%arg0: i32, %arg1: i32) -> (i32, i32) {
    %c0_i32 = arith.constant 0 : i32
    %c0_i32_0 = arith.constant 0 : i32
    %c0_i32_1 = arith.constant 0 : i32
    return %c0_i32, %c0_i32_0 : i32, i32
  }
  func.func @transform_3(%arg0: i32, %arg1: i32) -> (i32, i32) {
    %c0_i32 = arith.constant 0 : i32
    %c0_i32_0 = arith.constant 0 : i32
    %c0_i32_1 = arith.constant 0 : i32
    return %c0_i32, %c0_i32_0 : i32, i32
  }
  func.func @transform_4(%arg0: i32, %arg1: i32) -> (i32, i32) {
    %c0_i32 = arith.constant 0 : i32
    %c0_i32_0 = arith.constant 0 : i32
    %c0_i32_1 = arith.constant 0 : i32
    return %c0_i32, %c0_i32_0 : i32, i32
  }
  func.func @transform_5(%arg0: i32, %arg1: i32) -> (i32, i32) {
    %c0_i32 = arith.constant 0 : i32
    %c0_i32_0 = arith.constant 0 : i32
    %c0_i32_1 = arith.constant 0 : i32
    return %c0_i32, %c0_i32_0 : i32, i32
  }
  func.func @transform_6(%arg0: i32, %arg1: i32) -> (i32, i32) {
    %c0_i32 = arith.constant 0 : i32
    %c0_i32_0 = arith.constant 0 : i32
    %c0_i32_1 = arith.constant 0 : i32
    return %c0_i32, %c0_i32_0 : i32, i32
  }
  func.func @transform_7(%arg0: i32, %arg1: i32) -> (i32, i32) {
    %c0_i32 = arith.constant 0 : i32
    %c0_i32_0 = arith.constant 0 : i32
    %c0_i32_1 = arith.constant 0 : i32
    return %c0_i32, %c0_i32_0 : i32, i32
  }
  func.func @transform_8(%arg0: i32, %arg1: i32) -> (i32, i32) {
    %c0_i32 = arith.constant 0 : i32
    %c0_i32_0 = arith.constant 0 : i32
    %c0_i32_1 = arith.constant 0 : i32
    return %c0_i32, %c0_i32_0 : i32, i32
  }
  func.func @transform_9(%arg0: i32, %arg1: i32) -> (i32, i32) {
    %c0_i32 = arith.constant 0 : i32
    %c0_i32_0 = arith.constant 0 : i32
    %c0_i32_1 = arith.constant 0 : i32
    return %c0_i32, %c0_i32_0 : i32, i32
  }
  func.func @transform_10(%arg0: i32, %arg1: i32) -> (i32, i32) {
    %c0_i32 = arith.constant 0 : i32
    %c0_i32_0 = arith.constant 0 : i32
    %c0_i32_1 = arith.constant 0 : i32
    return %c0_i32, %c0_i32_0 : i32, i32
  }
  func.func @transform_11(%arg0: i32, %arg1: i32) -> (i32, i32) {
    %c0_i32 = arith.constant 0 : i32
    %c0_i32_0 = arith.constant 0 : i32
    %c0_i32_1 = arith.constant 0 : i32
    return %c0_i32, %c0_i32_0 : i32, i32
  }
  func.func @transform_12(%arg0: i32, %arg1: i32) -> (i32, i32) {
    %c0_i32 = arith.constant 0 : i32
    %c0_i32_0 = arith.constant 0 : i32
    %c0_i32_1 = arith.constant 0 : i32
    return %c0_i32, %c0_i32_0 : i32, i32
  }
  func.func @transform_13(%arg0: i32, %arg1: i32) -> (i32, i32) {
    %c0_i32 = arith.constant 0 : i32
    %c0_i32_0 = arith.constant 0 : i32
    %c0_i32_1 = arith.constant 0 : i32
    return %c0_i32, %c0_i32_0 : i32, i32
  }
  func.func @transform_14(%arg0: i32, %arg1: i32) -> (i32, i32) {
    %c0_i32 = arith.constant 0 : i32
    %c0_i32_0 = arith.constant 0 : i32
    %c0_i32_1 = arith.constant 0 : i32
    return %c0_i32, %c0_i32_0 : i32, i32
  }
  func.func @transform_15(%arg0: i32, %arg1: i32) -> (i32, i32) {
    %c0_i32 = arith.constant 0 : i32
    %c0_i32_0 = arith.constant 0 : i32
    %c0_i32_1 = arith.constant 0 : i32
    return %c0_i32, %c0_i32_0 : i32, i32
  }
  func.func @transform_16(%arg0: i32, %arg1: i32) -> (i32, i32) {
    %c0_i32 = arith.constant 0 : i32
    %c0_i32_0 = arith.constant 0 : i32
    %c0_i32_1 = arith.constant 0 : i32
    return %c0_i32, %c0_i32_0 : i32, i32
  }
  func.func @transform_17(%arg0: i32, %arg1: i32) -> (i32, i32) {
    %c0_i32 = arith.constant 0 : i32
    %c0_i32_0 = arith.constant 0 : i32
    %c0_i32_1 = arith.constant 0 : i32
    return %c0_i32, %c0_i32_0 : i32, i32
  }
  func.func @transform_18(%arg0: i32, %arg1: i32) -> (i32, i32, i32) {
    %c0_i32 = arith.constant 0 : i32
    %c0_i32_0 = arith.constant 0 : i32
    return %arg0, %arg1, %c0_i32 : i32, i32, i32
  }
}

</mosaic_0001>

<llo_original>
// kernel: tpu_custom_call.1
$region0: #{tpu_custom_call.1}
  #allocation0 [shape = 'u32[]', space=smem, size = 0x4, offset = 0x4, fixed_abs, tag = 'smem constant byte address 0x4 - core index']
  #allocation1 [shape = 'u32[72,128]{1,0:T(1,128)}', space=vmem, size = 0x9000, scoped, tag = 'internal scratch']
  #allocation2 [shape = 'f32[16,32]{1,0:T(8,128)}', space=vmem, size = 0x2000, scoped, tag = 'scratch operand']
  #allocation3 [shape = 'f32[16,32]{1,0:T(8,128)}', space=vmem, size = 0x2000, scoped, tag = 'scratch operand']
  %s0 = inlined_call_operand.vmem [shape: f32[2,16,32], index: 0, kind: input, shape index: {}]
  %s1 = inlined_call_operand.vmem [shape: f32[2,16,32], index: 1, kind: input, shape index: {}]
  %s2 = inlined_call_operand.vmem [shape: f32[32,32], index: 2, kind: input, shape index: {}]
  %s3 = inlined_call_operand.vmem [shape: f32[1,32], index: 3, kind: input, shape index: {}]
  %s4 = inlined_call_operand.hbm [shape: f32[32,32], index: 4, kind: input, shape index: {}]
  %s5 = inlined_call_operand.vmem [shape: f32[1,32], index: 5, kind: input, shape index: {}]
  %s6 = inlined_call_operand.hbm [shape: f32[32,32], index: 6, kind: input, shape index: {}]
  %s7 = inlined_call_operand.vmem [shape: f32[1,32], index: 7, kind: input, shape index: {}]
  %s8 = inlined_call_operand.hbm [shape: f32[32,32], index: 8, kind: input, shape index: {}]
  %s9 = inlined_call_operand.vmem [shape: f32[1,32], index: 9, kind: input, shape index: {}]
  %s10 = inlined_call_operand.vmem [shape: f32[1,32], index: 10, kind: input, shape index: {}]
  %s11 = inlined_call_operand.vmem [shape: f32[1,32], index: 11, kind: input, shape index: {}]
  %s12 = inlined_call_operand.hbm [shape: f32[32,64], index: 12, kind: input, shape index: {}]
  %s13 = inlined_call_operand.vmem [shape: f32[1,64], index: 13, kind: input, shape index: {}]
  %s14 = inlined_call_operand.vmem [shape: f32[64,32], index: 14, kind: input, shape index: {}]
  %s15 = inlined_call_operand.vmem [shape: f32[1,32], index: 15, kind: input, shape index: {}]
  %s16 = inlined_call_operand.vmem [shape: f32[1,32], index: 16, kind: input, shape index: {}]
  %s17 = inlined_call_operand.vmem [shape: f32[1,32], index: 17, kind: input, shape index: {}]
  %s18 = inlined_call_operand.hbm [shape: f32[2,16,32], index: 18, kind: output, shape index: {}]
  %s19 = sld [smem:[#allocation0]]
  $region125: #{tpu_custom_call.1} parent=0
    _
  %s21 = ssub.s32 1, %s19
  %s22 = scalar_select 0, %s21, %s19
  $region1: #{tpu_custom_call.1} parent=0
    #allocation4 [shape = 'u8[16384]{0}', space=vmem, size = 0x4000, scoped, tag = 'input window, operand 4, single buffered']
    #allocation5 [shape = 's32[2]{0}', space=sflag, size = 0x8, scoped, tag = 'scoped memory for tpu_custom_call.1']
    #allocation6 [shape = 's32[2]{0}', space=sflag, size = 0x8, scoped, tag = 'scoped memory for tpu_custom_call.1']
    #allocation7 [shape = 'u8[16384]{0}', space=vmem, size = 0x4000, scoped, tag = 'input window, operand 6, single buffered']
    #allocation8 [shape = 's32[1]{0}', space=sflag, size = 0x4, scoped, tag = 'scoped memory for tpu_custom_call.1']
    #allocation9 [shape = 'u8[16384]{0}', space=vmem, size = 0x4000, scoped, tag = 'input window, operand 8, single buffered']
    #allocation10 [shape = 'u8[16384]{0}', space=vmem, size = 0x4000, scoped, tag = 'input window, operand 12, single buffered']
    #allocation11 [shape = 's32[1]{0}', space=sflag, size = 0x4, scoped, tag = 'scoped memory for tpu_custom_call.1']
    #allocation12 [shape = 'u8[16384]{0}', space=vmem, size = 0x4000, scoped, tag = 'output window, operand 0']
    %23 = vsyncpa [#allocation5], 0
    %24 = vsyncpa [#allocation8], 0
    %25 = vsyncpa [#allocation11], 0
    %26 = vsyncpa [#allocation6], 0
    %s27 = scalar_lea.sflag [#allocation6], 1
    %28 = vsyncpa %s27, 0
    loop: start=0, step=1, limit=4
    $region2: #{tpu_custom_call.1} parent=1 // loop_pre_header
      _
    $region3: #{tpu_custom_call.1} parent=1 // loop_header
      %s30 = sphi 0, %s34
      %p31 = scmp.ge.s32.totalorder %s30, 4
      %s37 = sphi 0, %s49
      %s38 = sphi 0, %s45
      %s39 = sphi 0, %s37
      %s40 = sphi 0, %s38
      %s41 = sphi 0, %s39
      %s42 = sphi 0, %s40
      %s54 = sphi 0, %s56
      %s57 = sphi 0, %s54
      %s58 = sphi 0, %s57
      %s74 = sphi 0, %s58
      %s80 = sphi 0, %s82
      %s83 = sphi 0, %s80
      %s84 = sphi 0, %s83
      %s100 = sphi 0, %s84
      %s104 = sphi 0, %s104
      %s106 = sphi 0, %s104
      %s107 = sphi 0, %s106
      %s121 = sphi 0, %s107
      %s125 = sphi 0, %s125
      %s127 = sphi 0, %s125
      %s128 = sphi 0, %s127
      %s142 = sphi 0, %s128
      %s146 = sphi 0, %s146
      %s148 = sphi 0, %s146
      %s149 = sphi 0, %s148
      %s163 = sphi 0, %s149
      %s167 = sphi 0, %s167
      %s169 = sphi 0, %s167
      %s170 = sphi 0, %s169
      %s184 = sphi 0, %s170
      %s188 = sphi 0, %s188
      %s190 = sphi 0, %s188
      %s191 = sphi 0, %s190
      %s205 = sphi 0, %s191
      %s209 = sphi 0, %s209
      %s211 = sphi 0, %s209
      %s212 = sphi 0, %s211
      %s226 = sphi 0, %s212
      %s230 = sphi 0, %s230
      %s232 = sphi 0, %s230
      %s233 = sphi 0, %s232
      %s247 = sphi 0, %s233
      %s251 = sphi 0, %s251
      %s253 = sphi 0, %s251
      %s254 = sphi 0, %s253
      %s268 = sphi 0, %s254
      %s272 = sphi 0, %s272
      %s274 = sphi 0, %s272
      %s275 = sphi 0, %s274
      %s289 = sphi 0, %s275
      %s293 = sphi 0, %s293
      %s295 = sphi 0, %s293
      %s296 = sphi 0, %s295
      %s310 = sphi 0, %s296
      %s314 = sphi 0, %s314
      %s316 = sphi 0, %s314
      %s317 = sphi 0, %s316
      %s331 = sphi 0, %s317
      %s335 = sphi 0, %s335
      %s337 = sphi 0, %s335
      %s338 = sphi 0, %s337
      %s352 = sphi 0, %s338
      %s356 = sphi 0, %s356
      %s358 = sphi 0, %s356
      %s359 = sphi 0, %s358
      %s373 = sphi 0, %s359
      %s377 = sphi 0, %s377
      %s379 = sphi 0, %s377
      %s380 = sphi 0, %s379
      %s394 = sphi 0, %s380
      %s398 = sphi 0, %s398
      %s400 = sphi 0, %s398
      %s401 = sphi 0, %s400
      %s415 = sphi 0, %s401
      %s419 = sphi 0, %s419
      %s421 = sphi 0, %s419
      %s422 = sphi 0, %s421
      %s436 = sphi 0, %s422
      %s444 = sphi 0, %s446
      %s447 = sphi 0, %s444
      %s448 = sphi 0, %s447
      %s464 = sphi 0, %s448
    $region4: #{tpu_custom_call.1} parent=1 // loop_header_branch
      %33 = sbr.rel (%p31) target = $region8
    $region5: #{tpu_custom_call.1} parent=1 // loop_body
      %s35 = ssub.s32 %s30, 1
      %s36 = ssub.s32 %s30, 2
      %s43 = sadd.s32 1, %s38
      %p44 = scmp.ge.s32.totalorder %s43, 1
      %s45 = scalar_select %p44, 0, %s43
      %s46 = sadd.s32 1, %s37
      %s47 = scalar_select %p44, %s46, %s37
      %p48 = scmp.ge.s32.totalorder %s47, 2
      %s49 = scalar_select %p48, 0, %s47
      %s50 = ssub.s32 %s37, %s49
      %s51 = ssub.s32 %s38, %s45
      %s52 = sor.u32 %s50, %s51
      %p53 = scmp.eq.s32.totalorder %s52, 0
      %s55 = sadd.s32 %s54, 1
      %s56 = scalar_select %p53, %s54, %s55
      %p59 = pneg %p53
      %p60 = scmp.eq.s32.totalorder %s30, 1
      %p61 = por %p59, %p60
      %p62 = scmp.ne.s32.totalorder %s54, %s57
      %p63 = scmp.eq.s32.totalorder %s30, 0
      %p64 = por %p62, %p63
      %p65 = scmp.ne.s32.totalorder %s54, %s57
      %p66 = scmp.eq.s32.totalorder %s35, 1
      %p67 = por %p65, %p66
      %p68 = scmp.ne.s32.totalorder %s57, %s58
      %p69 = scmp.eq.s32.totalorder %s35, 0
      %p70 = por %p68, %p69
      %p71 = scmp.ne.s32.totalorder %s57, %s58
      %p72 = scmp.eq.s32.totalorder %s36, 1
      %p73 = por %p71, %p72
      %p75 = scmp.ne.s32.totalorder %s58, %s74
      %p76 = scmp.eq.s32.totalorder %s36, 0
      %p77 = por %p75, %p76
      %s78 = ssub.s32 %s37, %s49
      %p79 = scmp.eq.s32.totalorder %s78, 0
      %s81 = sadd.s32 %s80, 1
      %s82 = scalar_select %p79, %s80, %s81
      %p85 = pneg %p79
      %p86 = scmp.eq.s32.totalorder %s30, 1
      %p87 = por %p85, %p86
      %p88 = scmp.ne.s32.totalorder %s80, %s83
      %p89 = scmp.eq.s32.totalorder %s30, 0
      %p90 = por %p88, %p89
      %p91 = scmp.ne.s32.totalorder %s80, %s83
      %p92 = scmp.eq.s32.totalorder %s35, 1
      %p93 = por %p91, %p92
      %p94 = scmp.ne.s32.totalorder %s83, %s84
      %p95 = scmp.eq.s32.totalorder %s35, 0
      %p96 = por %p94, %p95
      %p97 = scmp.ne.s32.totalorder %s83, %s84
      %p98 = scmp.eq.s32.totalorder %s36, 1
      %p99 = por %p97, %p98
      %p101 = scmp.ne.s32.totalorder %s84, %s100
      %p102 = scmp.eq.s32.totalorder %s36, 0
      %p103 = por %p101, %p102
      %s105 = sadd.s32 %s104, 1
      %p108 = scmp.eq.s32.totalorder %s30, 1
      %p109 = scmp.ne.s32.totalorder %s104, %s106
      %p110 = scmp.eq.s32.totalorder %s30, 0
      %p111 = por %p109, %p110
      %p112 = scmp.ne.s32.totalorder %s104, %s106
      %p113 = scmp.eq.s32.totalorder %s35, 1
      %p114 = por %p112, %p113
      %p115 = scmp.ne.s32.totalorder %s106, %s107
      %p116 = scmp.eq.s32.totalorder %s35, 0
      %p117 = por %p115, %p116
      %p118 = scmp.ne.s32.totalorder %s106, %s107
      %p119 = scmp.eq.s32.totalorder %s36, 1
      %p120 = por %p118, %p119
      %p122 = scmp.ne.s32.totalorder %s107, %s121
      %p123 = scmp.eq.s32.totalorder %s36, 0
      %p124 = por %p122, %p123
      %s126 = sadd.s32 %s125, 1
      %p129 = scmp.eq.s32.totalorder %s30, 1
      %p130 = scmp.ne.s32.totalorder %s125, %s127
      %p131 = scmp.eq.s32.totalorder %s30, 0
      %p132 = por %p130, %p131
      %p133 = scmp.ne.s32.totalorder %s125, %s127
      %p134 = scmp.eq.s32.totalorder %s35, 1
      %p135 = por %p133, %p134
      %p136 = scmp.ne.s32.totalorder %s127, %s128
      %p137 = scmp.eq.s32.totalorder %s35, 0
      %p138 = por %p136, %p137
      %p139 = scmp.ne.s32.totalorder %s127, %s128
      %p140 = scmp.eq.s32.totalorder %s36, 1
      %p141 = por %p139, %p140
      %p143 = scmp.ne.s32.totalorder %s128, %s142
      %p144 = scmp.eq.s32.totalorder %s36, 0
      %p145 = por %p143, %p144
      %s147 = sadd.s32 %s146, 1
      %p150 = scmp.eq.s32.totalorder %s30, 1
      %p151 = scmp.ne.s32.totalorder %s146, %s148
      %p152 = scmp.eq.s32.totalorder %s30, 0
      %p153 = por %p151, %p152
      %p154 = scmp.ne.s32.totalorder %s146, %s148
      %p155 = scmp.eq.s32.totalorder %s35, 1
      %p156 = por %p154, %p155
      %p157 = scmp.ne.s32.totalorder %s148, %s149
      %p158 = scmp.eq.s32.totalorder %s35, 0
      %p159 = por %p157, %p158
      %p160 = scmp.ne.s32.totalorder %s148, %s149
      %p161 = scmp.eq.s32.totalorder %s36, 1
      %p162 = por %p160, %p161
      %p164 = scmp.ne.s32.totalorder %s149, %s163
      %p165 = scmp.eq.s32.totalorder %s36, 0
      %p166 = por %p164, %p165
      %s168 = sadd.s32 %s167, 1
      %p171 = scmp.eq.s32.totalorder %s30, 1
      %p172 = scmp.ne.s32.totalorder %s167, %s169
      %p173 = scmp.eq.s32.totalorder %s30, 0
      %p174 = por %p172, %p173
      %p175 = scmp.ne.s32.totalorder %s167, %s169
      %p176 = scmp.eq.s32.totalorder %s35, 1
      %p177 = por %p175, %p176
      %p178 = scmp.ne.s32.totalorder %s169, %s170
      %p179 = scmp.eq.s32.totalorder %s35, 0
      %p180 = por %p178, %p179
      %p181 = scmp.ne.s32.totalorder %s169, %s170
      %p182 = scmp.eq.s32.totalorder %s36, 1
      %p183 = por %p181, %p182
      %p185 = scmp.ne.s32.totalorder %s170, %s184
      %p186 = scmp.eq.s32.totalorder %s36, 0
      %p187 = por %p185, %p186
      %s189 = sadd.s32 %s188, 1
      %p192 = scmp.eq.s32.totalorder %s30, 1
      %p193 = scmp.ne.s32.totalorder %s188, %s190
      %p194 = scmp.eq.s32.totalorder %s30, 0
      %p195 = por %p193, %p194
      %p196 = scmp.ne.s32.totalorder %s188, %s190
      %p197 = scmp.eq.s32.totalorder %s35, 1
      %p198 = por %p196, %p197
      %p199 = scmp.ne.s32.totalorder %s190, %s191
      %p200 = scmp.eq.s32.totalorder %s35, 0
      %p201 = por %p199, %p200
      %p202 = scmp.ne.s32.totalorder %s190, %s191
      %p203 = scmp.eq.s32.totalorder %s36, 1
      %p204 = por %p202, %p203
      %p206 = scmp.ne.s32.totalorder %s191, %s205
      %p207 = scmp.eq.s32.totalorder %s36, 0
      %p208 = por %p206, %p207
      %s210 = sadd.s32 %s209, 1
      %p213 = scmp.eq.s32.totalorder %s30, 1
      %p214 = scmp.ne.s32.totalorder %s209, %s211
      %p215 = scmp.eq.s32.totalorder %s30, 0
      %p216 = por %p214, %p215
      %p217 = scmp.ne.s32.totalorder %s209, %s211
      %p218 = scmp.eq.s32.totalorder %s35, 1
      %p219 = por %p217, %p218
      %p220 = scmp.ne.s32.totalorder %s211, %s212
      %p221 = scmp.eq.s32.totalorder %s35, 0
      %p222 = por %p220, %p221
      %p223 = scmp.ne.s32.totalorder %s211, %s212
      %p224 = scmp.eq.s32.totalorder %s36, 1
      %p225 = por %p223, %p224
      %p227 = scmp.ne.s32.totalorder %s212, %s226
      %p228 = scmp.eq.s32.totalorder %s36, 0
      %p229 = por %p227, %p228
      %s231 = sadd.s32 %s230, 1
      %p234 = scmp.eq.s32.totalorder %s30, 1
      %p235 = scmp.ne.s32.totalorder %s230, %s232
      %p236 = scmp.eq.s32.totalorder %s30, 0
      %p237 = por %p235, %p236
      %p238 = scmp.ne.s32.totalorder %s230, %s232
      %p239 = scmp.eq.s32.totalorder %s35, 1
      %p240 = por %p238, %p239
      %p241 = scmp.ne.s32.totalorder %s232, %s233
      %p242 = scmp.eq.s32.totalorder %s35, 0
      %p243 = por %p241, %p242
      %p244 = scmp.ne.s32.totalorder %s232, %s233
      %p245 = scmp.eq.s32.totalorder %s36, 1
      %p246 = por %p244, %p245
      %p248 = scmp.ne.s32.totalorder %s233, %s247
      %p249 = scmp.eq.s32.totalorder %s36, 0
      %p250 = por %p248, %p249
      %s252 = sadd.s32 %s251, 1
      %p255 = scmp.eq.s32.totalorder %s30, 1
      %p256 = scmp.ne.s32.totalorder %s251, %s253
      %p257 = scmp.eq.s32.totalorder %s30, 0
      %p258 = por %p256, %p257
      %p259 = scmp.ne.s32.totalorder %s251, %s253
      %p260 = scmp.eq.s32.totalorder %s35, 1
      %p261 = por %p259, %p260
      %p262 = scmp.ne.s32.totalorder %s253, %s254
      %p263 = scmp.eq.s32.totalorder %s35, 0
      %p264 = por %p262, %p263
      %p265 = scmp.ne.s32.totalorder %s253, %s254
      %p266 = scmp.eq.s32.totalorder %s36, 1
      %p267 = por %p265, %p266
      %p269 = scmp.ne.s32.totalorder %s254, %s268
      %p270 = scmp.eq.s32.totalorder %s36, 0
      %p271 = por %p269, %p270
      %s273 = sadd.s32 %s272, 1
      %p276 = scmp.eq.s32.totalorder %s30, 1
      %p277 = scmp.ne.s32.totalorder %s272, %s274
      %p278 = scmp.eq.s32.totalorder %s30, 0
      %p279 = por %p277, %p278
      %p280 = scmp.ne.s32.totalorder %s272, %s274
      %p281 = scmp.eq.s32.totalorder %s35, 1
      %p282 = por %p280, %p281
      %p283 = scmp.ne.s32.totalorder %s274, %s275
      %p284 = scmp.eq.s32.totalorder %s35, 0
      %p285 = por %p283, %p284
      %p286 = scmp.ne.s32.totalorder %s274, %s275
      %p287 = scmp.eq.s32.totalorder %s36, 1
      %p288 = por %p286, %p287
      %p290 = scmp.ne.s32.totalorder %s275, %s289
      %p291 = scmp.eq.s32.totalorder %s36, 0
      %p292 = por %p290, %p291
      %s294 = sadd.s32 %s293, 1
      %p297 = scmp.eq.s32.totalorder %s30, 1
      %p298 = scmp.ne.s32.totalorder %s293, %s295
      %p299 = scmp.eq.s32.totalorder %s30, 0
      %p300 = por %p298, %p299
      %p301 = scmp.ne.s32.totalorder %s293, %s295
      %p302 = scmp.eq.s32.totalorder %s35, 1
      %p303 = por %p301, %p302
      %p304 = scmp.ne.s32.totalorder %s295, %s296
      %p305 = scmp.eq.s32.totalorder %s35, 0
      %p306 = por %p304, %p305
      %p307 = scmp.ne.s32.totalorder %s295, %s296
      %p308 = scmp.eq.s32.totalorder %s36, 1
      %p309 = por %p307, %p308
      %p311 = scmp.ne.s32.totalorder %s296, %s310
      %p312 = scmp.eq.s32.totalorder %s36, 0
      %p313 = por %p311, %p312
      %s315 = sadd.s32 %s314, 1
      %p318 = scmp.eq.s32.totalorder %s30, 1
      %p319 = scmp.ne.s32.totalorder %s314, %s316
      %p320 = scmp.eq.s32.totalorder %s30, 0
      %p321 = por %p319, %p320
      %p322 = scmp.ne.s32.totalorder %s314, %s316
      %p323 = scmp.eq.s32.totalorder %s35, 1
      %p324 = por %p322, %p323
      %p325 = scmp.ne.s32.totalorder %s316, %s317
      %p326 = scmp.eq.s32.totalorder %s35, 0
      %p327 = por %p325, %p326
      %p328 = scmp.ne.s32.totalorder %s316, %s317
      %p329 = scmp.eq.s32.totalorder %s36, 1
      %p330 = por %p328, %p329
      %p332 = scmp.ne.s32.totalorder %s317, %s331
      %p333 = scmp.eq.s32.totalorder %s36, 0
      %p334 = por %p332, %p333
      %s336 = sadd.s32 %s335, 1
      %p339 = scmp.eq.s32.totalorder %s30, 1
      %p340 = scmp.ne.s32.totalorder %s335, %s337
      %p341 = scmp.eq.s32.totalorder %s30, 0
      %p342 = por %p340, %p341
      %p343 = scmp.ne.s32.totalorder %s335, %s337
      %p344 = scmp.eq.s32.totalorder %s35, 1
      %p345 = por %p343, %p344
      %p346 = scmp.ne.s32.totalorder %s337, %s338
      %p347 = scmp.eq.s32.totalorder %s35, 0
      %p348 = por %p346, %p347
      %p349 = scmp.ne.s32.totalorder %s337, %s338
      %p350 = scmp.eq.s32.totalorder %s36, 1
      %p351 = por %p349, %p350
      %p353 = scmp.ne.s32.totalorder %s338, %s352
      %p354 = scmp.eq.s32.totalorder %s36, 0
      %p355 = por %p353, %p354
      %s357 = sadd.s32 %s356, 1
      %p360 = scmp.eq.s32.totalorder %s30, 1
      %p361 = scmp.ne.s32.totalorder %s356, %s358
      %p362 = scmp.eq.s32.totalorder %s30, 0
      %p363 = por %p361, %p362
      %p364 = scmp.ne.s32.totalorder %s356, %s358
      %p365 = scmp.eq.s32.totalorder %s35, 1
      %p366 = por %p364, %p365
      %p367 = scmp.ne.s32.totalorder %s358, %s359
      %p368 = scmp.eq.s32.totalorder %s35, 0
      %p369 = por %p367, %p368
      %p370 = scmp.ne.s32.totalorder %s358, %s359
      %p371 = scmp.eq.s32.totalorder %s36, 1
      %p372 = por %p370, %p371
      %p374 = scmp.ne.s32.totalorder %s359, %s373
      %p375 = scmp.eq.s32.totalorder %s36, 0
      %p376 = por %p374, %p375
      %s378 = sadd.s32 %s377, 1
      %p381 = scmp.eq.s32.totalorder %s30, 1
      %p382 = scmp.ne.s32.totalorder %s377, %s379
      %p383 = scmp.eq.s32.totalorder %s30, 0
      %p384 = por %p382, %p383
      %p385 = scmp.ne.s32.totalorder %s377, %s379
      %p386 = scmp.eq.s32.totalorder %s35, 1
      %p387 = por %p385, %p386
      %p388 = scmp.ne.s32.totalorder %s379, %s380
      %p389 = scmp.eq.s32.totalorder %s35, 0
      %p390 = por %p388, %p389
      %p391 = scmp.ne.s32.totalorder %s379, %s380
      %p392 = scmp.eq.s32.totalorder %s36, 1
      %p393 = por %p391, %p392
      %p395 = scmp.ne.s32.totalorder %s380, %s394
      %p396 = scmp.eq.s32.totalorder %s36, 0
      %p397 = por %p395, %p396
      %s399 = sadd.s32 %s398, 1
      %p402 = scmp.eq.s32.totalorder %s30, 1
      %p403 = scmp.ne.s32.totalorder %s398, %s400
      %p404 = scmp.eq.s32.totalorder %s30, 0
      %p405 = por %p403, %p404
      %p406 = scmp.ne.s32.totalorder %s398, %s400
      %p407 = scmp.eq.s32.totalorder %s35, 1
      %p408 = por %p406, %p407
      %p409 = scmp.ne.s32.totalorder %s400, %s401
      %p410 = scmp.eq.s32.totalorder %s35, 0
      %p411 = por %p409, %p410
      %p412 = scmp.ne.s32.totalorder %s400, %s401
      %p413 = scmp.eq.s32.totalorder %s36, 1
      %p414 = por %p412, %p413
      %p416 = scmp.ne.s32.totalorder %s401, %s415
      %p417 = scmp.eq.s32.totalorder %s36, 0
      %p418 = por %p416, %p417
      %s420 = sadd.s32 %s419, 1
      %p423 = scmp.eq.s32.totalorder %s30, 1
      %p424 = scmp.ne.s32.totalorder %s419, %s421
      %p425 = scmp.eq.s32.totalorder %s30, 0
      %p426 = por %p424, %p425
      %p427 = scmp.ne.s32.totalorder %s419, %s421
      %p428 = scmp.eq.s32.totalorder %s35, 1
      %p429 = por %p427, %p428
      %p430 = scmp.ne.s32.totalorder %s421, %s422
      %p431 = scmp.eq.s32.totalorder %s35, 0
      %p432 = por %p430, %p431
      %p433 = scmp.ne.s32.totalorder %s421, %s422
      %p434 = scmp.eq.s32.totalorder %s36, 1
      %p435 = por %p433, %p434
      %p437 = scmp.ne.s32.totalorder %s422, %s436
      %p438 = scmp.eq.s32.totalorder %s36, 0
      %p439 = por %p437, %p438
      %s440 = ssub.s32 %s37, %s49
      %s441 = ssub.s32 %s38, %s45
      %s442 = sor.u32 %s440, %s441
      %p443 = scmp.eq.s32.totalorder %s442, 0
      %s445 = sadd.s32 %s444, 1
      %s446 = scalar_select %p443, %s444, %s445
      %p449 = pneg %p443
      %p450 = scmp.eq.s32.totalorder %s30, 1
      %p451 = por %p449, %p450
      %p452 = scmp.ne.s32.totalorder %s444, %s447
      %p453 = scmp.eq.s32.totalorder %s30, 0
      %p454 = por %p452, %p453
      %p455 = scmp.ne.s32.totalorder %s444, %s447
      %p456 = scmp.eq.s32.totalorder %s35, 1
      %p457 = por %p455, %p456
      %p458 = scmp.ne.s32.totalorder %s447, %s448
      %p459 = scmp.eq.s32.totalorder %s35, 0
      %p460 = por %p458, %p459
      %p461 = scmp.ne.s32.totalorder %s447, %s448
      %p462 = scmp.eq.s32.totalorder %s36, 1
      %p463 = por %p461, %p462
      %p465 = scmp.ne.s32.totalorder %s448, %s464
      %p466 = scmp.eq.s32.totalorder %s36, 0
      %p467 = por %p465, %p466
      %p468 = scmp.le.s32.totalorder 1, %s30
      %p469 = scmp.lt.s32.totalorder %s30, 3
      %p470 = pnand %p468, %p469
      %p471 = pneg %p470
      // Predicated region
      $region9: #{tpu_custom_call.1} parent=5 // pred_check
        _
      $region10: #{tpu_custom_call.1} parent=5 // pred_check_branch
        %473 = sbr.rel (%p470) target = $region12
      $region11: #{tpu_custom_call.1} parent=5 // pred_region
        %s474 = ssub.s32 %s30, 1
        // Predicated region
        $region13: #{tpu_custom_call.1} parent=11 // pred_check
          %p475 = pneg %p117
        $region14: #{tpu_custom_call.1} parent=11 // pred_check_branch
          %477 = sbr.rel (%p475) target = $region16
        $region15: #{tpu_custom_call.1} parent=11 // pred_region
          _
        $region16: #{tpu_custom_call.1} parent=11 // pred_fallthru
          _
        // Predicated region
        $region17: #{tpu_custom_call.1} parent=11 // pred_check
          %p478 = pneg %p138
        $region18: #{tpu_custom_call.1} parent=11 // pred_check_branch
          %480 = sbr.rel (%p478) target = $region20
        $region19: #{tpu_custom_call.1} parent=11 // pred_region
          _
        $region20: #{tpu_custom_call.1} parent=11 // pred_fallthru
          _
        // Predicated region
        $region21: #{tpu_custom_call.1} parent=11 // pred_check
          %p481 = pneg %p159
        $region22: #{tpu_custom_call.1} parent=11 // pred_check_branch
          %483 = sbr.rel (%p481) target = $region24
        $region23: #{tpu_custom_call.1} parent=11 // pred_region
          %485 = vsyncadd [#allocation5], 0
          %s486 = sshll.u32 %s4, 4
          %s487 = int_to_ptr.hbm [resolvable:$true] %s486
          %s488 = sshll.u32 [#allocation4], 4
          %s489 = int_to_ptr.vmem [resolvable:$true] %s488
          %494 = dma.hbm_to_vmem [thread:$0]  %s487, 512, %s489, [#allocation5], 128, 128, 8
        $region24: #{tpu_custom_call.1} parent=11 // pred_fallthru
          _
        // Predicated region
        $region25: #{tpu_custom_call.1} parent=11 // pred_check
          %p495 = pneg %p180
        $region26: #{tpu_custom_call.1} parent=11 // pred_check_branch
          %497 = sbr.rel (%p495) target = $region28
        $region27: #{tpu_custom_call.1} parent=11 // pred_region
          _
        $region28: #{tpu_custom_call.1} parent=11 // pred_fallthru
          _
        // Predicated region
        $region29: #{tpu_custom_call.1} parent=11 // pred_check
          %p498 = pneg %p201
        $region30: #{tpu_custom_call.1} parent=11 // pred_check_branch
          %500 = sbr.rel (%p498) target = $region32
        $region31: #{tpu_custom_call.1} parent=11 // pred_region
          %502 = vsyncadd [#allocation8], 0
          %s503 = sshll.u32 %s6, 4
          %s504 = int_to_ptr.hbm [resolvable:$true] %s503
          %s505 = sshll.u32 [#allocation7], 4
          %s506 = int_to_ptr.vmem [resolvable:$true] %s505
          %511 = dma.hbm_to_vmem [thread:$0]  %s504, 512, %s506, [#allocation8], 128, 128, 8
        $region32: #{tpu_custom_call.1} parent=11 // pred_fallthru
          _
        // Predicated region
        $region33: #{tpu_custom_call.1} parent=11 // pred_check
          %p512 = pneg %p222
        $region34: #{tpu_custom_call.1} parent=11 // pred_check_branch
          %514 = sbr.rel (%p512) target = $region36
        $region35: #{tpu_custom_call.1} parent=11 // pred_region
          _
        $region36: #{tpu_custom_call.1} parent=11 // pred_fallthru
          _
        // Predicated region
        $region37: #{tpu_custom_call.1} parent=11 // pred_check
          %p515 = pneg %p243
        $region38: #{tpu_custom_call.1} parent=11 // pred_check_branch
          %517 = sbr.rel (%p515) target = $region40
        $region39: #{tpu_custom_call.1} parent=11 // pred_region
          %519 = vsyncadd [#allocation8], 0
          %s520 = sshll.u32 %s8, 4
          %s521 = int_to_ptr.hbm [resolvable:$true] %s520
          %s522 = sshll.u32 [#allocation9], 4
          %s523 = int_to_ptr.vmem [resolvable:$true] %s522
          %528 = dma.hbm_to_vmem [thread:$0]  %s521, 512, %s523, [#allocation8], 128, 128, 8
        $region40: #{tpu_custom_call.1} parent=11 // pred_fallthru
          _
        // Predicated region
        $region41: #{tpu_custom_call.1} parent=11 // pred_check
          %p529 = pneg %p264
        $region42: #{tpu_custom_call.1} parent=11 // pred_check_branch
          %531 = sbr.rel (%p529) target = $region44
        $region43: #{tpu_custom_call.1} parent=11 // pred_region
          _
        $region44: #{tpu_custom_call.1} parent=11 // pred_fallthru
          _
        // Predicated region
        $region45: #{tpu_custom_call.1} parent=11 // pred_check
          %p532 = pneg %p285
        $region46: #{tpu_custom_call.1} parent=11 // pred_check_branch
          %534 = sbr.rel (%p532) target = $region48
        $region47: #{tpu_custom_call.1} parent=11 // pred_region
          _
        $region48: #{tpu_custom_call.1} parent=11 // pred_fallthru
          _
        // Predicated region
        $region49: #{tpu_custom_call.1} parent=11 // pred_check
          %p535 = pneg %p306
        $region50: #{tpu_custom_call.1} parent=11 // pred_check_branch
          %537 = sbr.rel (%p535) target = $region52
        $region51: #{tpu_custom_call.1} parent=11 // pred_region
          _
        $region52: #{tpu_custom_call.1} parent=11 // pred_fallthru
          _
        // Predicated region
        $region53: #{tpu_custom_call.1} parent=11 // pred_check
          %p538 = pneg %p327
        $region54: #{tpu_custom_call.1} parent=11 // pred_check_branch
          %540 = sbr.rel (%p538) target = $region56
        $region55: #{tpu_custom_call.1} parent=11 // pred_region
          %542 = vsyncadd [#allocation11], 0
          %s543 = sshll.u32 %s12, 4
          %s544 = int_to_ptr.hbm [resolvable:$true] %s543
          %s545 = sshll.u32 [#allocation10], 4
          %s546 = int_to_ptr.vmem [resolvable:$true] %s545
          %551 = dma.hbm_to_vmem [thread:$0]  %s544, 512, %s546, [#allocation11], 128, 128, 8
        $region56: #{tpu_custom_call.1} parent=11 // pred_fallthru
          _
        // Predicated region
        $region57: #{tpu_custom_call.1} parent=11 // pred_check
          %p552 = pneg %p348
        $region58: #{tpu_custom_call.1} parent=11 // pred_check_branch
          %554 = sbr.rel (%p552) target = $region60
        $region59: #{tpu_custom_call.1} parent=11 // pred_region
          _
        $region60: #{tpu_custom_call.1} parent=11 // pred_fallthru
          _
        // Predicated region
        $region61: #{tpu_custom_call.1} parent=11 // pred_check
          %p555 = pneg %p369
        $region62: #{tpu_custom_call.1} parent=11 // pred_check_branch
          %557 = sbr.rel (%p555) target = $region64
        $region63: #{tpu_custom_call.1} parent=11 // pred_region
          _
        $region64: #{tpu_custom_call.1} parent=11 // pred_fallthru
          _
        // Predicated region
        $region65: #{tpu_custom_call.1} parent=11 // pred_check
          %p558 = pneg %p390
        $region66: #{tpu_custom_call.1} parent=11 // pred_check_branch
          %560 = sbr.rel (%p558) target = $region68
        $region67: #{tpu_custom_call.1} parent=11 // pred_region
          _
        $region68: #{tpu_custom_call.1} parent=11 // pred_fallthru
          _
        // Predicated region
        $region69: #{tpu_custom_call.1} parent=11 // pred_check
          %p561 = pneg %p411
        $region70: #{tpu_custom_call.1} parent=11 // pred_check_branch
          %563 = sbr.rel (%p561) target = $region72
        $region71: #{tpu_custom_call.1} parent=11 // pred_region
          _
        $region72: #{tpu_custom_call.1} parent=11 // pred_fallthru
          _
        // Predicated region
        $region73: #{tpu_custom_call.1} parent=11 // pred_check
          %p564 = pneg %p432
        $region74: #{tpu_custom_call.1} parent=11 // pred_check_branch
          %566 = sbr.rel (%p564) target = $region76
        $region75: #{tpu_custom_call.1} parent=11 // pred_region
          _
        $region76: #{tpu_custom_call.1} parent=11 // pred_fallthru
          _
      $region12: #{tpu_custom_call.1} parent=5 // pred_fallthru
        _
      %p567 = scmp.lt.s32.totalorder %s30, 2
      // Predicated region
      $region77: #{tpu_custom_call.1} parent=5 // pred_check
        %p568 = pneg %p567
      $region78: #{tpu_custom_call.1} parent=5 // pred_check_branch
        %570 = sbr.rel (%p568) target = $region80
      $region79: #{tpu_custom_call.1} parent=5 // pred_region
        // Predicated region
        $region81: #{tpu_custom_call.1} parent=79 // pred_check
          %p571 = pneg %p64
        $region82: #{tpu_custom_call.1} parent=79 // pred_check_branch
          %573 = sbr.rel (%p571) target = $region84
        $region83: #{tpu_custom_call.1} parent=79 // pred_region
          %s574 = smul.u32 2, %s38
          %p575 = scmp.lt.s32.totalorder %s37, 1
          %s576 = scalar_select %p575, %s37, 1
          %p577 = scmp.lt.s32.totalorder %s574, 1
          %s578 = scalar_select %p577, %s574, 1
          %s579 = smul.addr %s576, 2
          %s580 = sadd.s32 %s578, %s579
          %s581 = smul.addr %s580, 8
          %s582 = scalar_lea.vmem %s0, %s581
          %s583 = smul.u32 2, %s38
        $region84: #{tpu_custom_call.1} parent=79 // pred_fallthru
          _
        // Predicated region
        $region85: #{tpu_custom_call.1} parent=79 // pred_check
          %p584 = pneg %p90
        $region86: #{tpu_custom_call.1} parent=79 // pred_check_branch
          %586 = sbr.rel (%p584) target = $region88
        $region87: #{tpu_custom_call.1} parent=79 // pred_region
          %p587 = scmp.lt.s32.totalorder %s37, 1
          %s588 = scalar_select %p587, %s37, 1
          %s589 = smul.addr %s588, 2
          %s590 = smul.addr %s589, 8
          %s591 = scalar_lea.vmem %s1, %s590
        $region88: #{tpu_custom_call.1} parent=79 // pred_fallthru
          _
      $region80: #{tpu_custom_call.1} parent=5 // pred_fallthru
        _
      %p592 = scmp.le.s32.totalorder 1, %s30
      %p593 = scmp.lt.s32.totalorder %s30, 3
      %p594 = pnand %p592, %p593
      %p595 = pneg %p594
      // Predicated region
      $region89: #{tpu_custom_call.1} parent=5 // pred_check
        _
      $region90: #{tpu_custom_call.1} parent=5 // pred_check_branch
        %597 = sbr.rel (%p594) target = $region92
      $region91: #{tpu_custom_call.1} parent=5 // pred_region
        %s598 = ssub.s32 %s30, 1
        // Predicated region
        $region93: #{tpu_custom_call.1} parent=91 // pred_check
          %p599 = pneg %p159
        $region94: #{tpu_custom_call.1} parent=91 // pred_check_branch
          %601 = sbr.rel (%p599) target = $region96
        $region95: #{tpu_custom_call.1} parent=91 // pred_region
          %603 = dma.done [#allocation5], 512
        $region96: #{tpu_custom_call.1} parent=91 // pred_fallthru
          _
        // Predicated region
        $region97: #{tpu_custom_call.1} parent=91 // pred_check
          %p604 = pneg %p201
        $region98: #{tpu_custom_call.1} parent=91 // pred_check_branch
          %606 = sbr.rel (%p604) target = $region100
        $region99: #{tpu_custom_call.1} parent=91 // pred_region
          %608 = dma.done [#allocation8], 512
        $region100: #{tpu_custom_call.1} parent=91 // pred_fallthru
          _
        // Predicated region
        $region101: #{tpu_custom_call.1} parent=91 // pred_check
          %p609 = pneg %p243
        $region102: #{tpu_custom_call.1} parent=91 // pred_check_branch
          %611 = sbr.rel (%p609) target = $region104
        $region103: #{tpu_custom_call.1} parent=91 // pred_region
          %613 = dma.done [#allocation8], 512
        $region104: #{tpu_custom_call.1} parent=91 // pred_fallthru
          _
        // Predicated region
        $region105: #{tpu_custom_call.1} parent=91 // pred_check
          %p614 = pneg %p327
        $region106: #{tpu_custom_call.1} parent=91 // pred_check_branch
          %616 = sbr.rel (%p614) target = $region108
        $region107: #{tpu_custom_call.1} parent=91 // pred_region
          %618 = dma.done [#allocation11], 512
        $region108: #{tpu_custom_call.1} parent=91 // pred_fallthru
          _
        %s619 = smul.u32 2, %s40
        %p620 = scmp.lt.s32.totalorder %s39, 1
        %s621 = scalar_select %p620, %s39, 1
        %p622 = scmp.lt.s32.totalorder %s619, 1
        %s623 = scalar_select %p622, %s619, 1
        %s624 = smul.addr %s621, 2
        %s625 = sadd.s32 %s623, %s624
        %s626 = smul.addr %s625, 8
        %s627 = scalar_lea.vmem %s0, %s626
        %p628 = pneg %p70
        %p629 = pneg %p67
        %p630 = scmp.lt.s32.totalorder %s39, 1
        %s631 = scalar_select %p630, %s39, 1
        %s632 = smul.addr %s631, 2
        %s633 = smul.addr %s632, 8
        %s634 = scalar_lea.vmem %s1, %s633
        %p635 = pneg %p96
        %p636 = pneg %p93
        %p637 = pneg %p117
        %p638 = pneg %p114
        %p639 = pneg %p138
        %p640 = pneg %p135
        %p641 = pneg %p159
        %p642 = pneg %p156
        %p643 = pneg %p180
        %p644 = pneg %p177
        %p645 = pneg %p201
        %p646 = pneg %p198
        %p647 = pneg %p222
        %p648 = pneg %p219
        %p649 = pneg %p243
        %p650 = pneg %p240
        %p651 = pneg %p264
        %p652 = pneg %p261
        %p653 = pneg %p285
        %p654 = pneg %p282
        %p655 = pneg %p306
        %p656 = pneg %p303
        %p657 = pneg %p327
        %p658 = pneg %p324
        %p659 = pneg %p348
        %p660 = pneg %p345
        %p661 = pneg %p369
        %p662 = pneg %p366
        %p663 = pneg %p390
        %p664 = pneg %p387
        %p665 = pneg %p411
        %p666 = pneg %p408
        %p667 = pneg %p432
        %p668 = pneg %p429
        %p669 = pneg %p460
        %p670 = pneg %p457
        %s671 = sand.u32 %s447, 1
        %s672 = scalar_lea.sflag [#allocation6], %s671
        %s673 = sand.u32 %s447, 1
        %s674 = smul.addr %s673, 16
        %s675 = scalar_lea.vmem [#allocation12], %s674
        %s676 = smul.u32 2, %s40
        %p677 = scmp.lt.s32.totalorder %s39, 1
        %s678 = scalar_select %p677, %s39, 1
        %p679 = scmp.lt.s32.totalorder %s676, 1
        %s680 = scalar_select %p679, %s676, 1
        %s681 = smul.addr %s678, 2
        %s682 = sadd.s32 %s680, %s681
        %s683 = smul.addr %s682, 8
        %s684 = scalar_lea.vmem %s0, %s683
        %s685 = smul.u32 2, %s40
        %p686 = scmp.lt.s32.totalorder %s39, 1
        %s687 = scalar_select %p686, %s39, 1
        %s688 = smul.addr %s687, 2
        %s689 = smul.addr %s688, 8
        %s690 = scalar_lea.vmem %s1, %s689
        %s691 = smul.u32 2, %s40
        %p692 = scmp.eq.s32.totalorder %s40, 0
        // Predicated region
        $region109: #{tpu_custom_call.1} parent=91 // pred_check
          %p693 = pneg %p692
        $region110: #{tpu_custom_call.1} parent=91 // pred_check_branch
          %695 = sbr.rel (%p693) target = $region112
        $region111: #{tpu_custom_call.1} parent=91 // pred_region
          %v696 = vld [vmem:[%s690] sm:$0xff]
          %v697 = vld [vmem:[%s690 + $0x8] sm:$0xff]
          %v698 = vld [vmem:[#allocation4] sm:$0xff]
          %v699 = vld [vmem:[#allocation4 + $0x8] sm:$0xff]
          %v700 = vld [vmem:[#allocation4 + $0x10] sm:$0xff]
          %v701 = vld [vmem:[#allocation4 + $0x18] sm:$0xff]
          %v702 = vld [vmem:[%s5] sm:$0x1]
          %v704 = vperm.slane %v702, 0
          %vm706 = vcmask 261120
          %v708 = vsel %vm706, %v696, 0
          %v711 = vsel %vm706, %v697, 0
          %713 = vmatpush.msra.mxu0 0.0
          %714 = vmatpush.msra.mxu0 0.0
          %715 = vmatpush.msra.mxu0 0.0
          %716 = vmatpush.msra.mxu0 0.0
          %717 = vmatpush.msra.mxu0 0.0
          %718 = vmatpush.msra.mxu0 0.0
          %719 = vmatpush.msra.mxu0 0.0
          %720 = vmatpush.msra.mxu0 0.0
          %721 = vmatpush.msra.mxu0 0.0
          %722 = vmatpush.msra.mxu0 0.0
          %723 = vmatpush.msra.mxu0 0.0
          %724 = vmatpush.msra.mxu0 0.0
          %725 = vmatpush.msra.mxu0 %v701
          %726 = vmatpush.msra.mxu0 %v700
          %727 = vmatpush.msra.mxu0 %v699
          %728 = vmatpush.msra.mxu0 %v698
          %729 = vmatmul.f32.gmra.mxu0 %v708
          %v730 = vpop.f32.mrf.mxu0
          %v731 = vadd.f32 %v704, %v730
          %732 = vmatmul.f32.gmra.mxu0 %v711
          %v733 = vpop.f32.mrf.mxu0
          %v734 = vadd.f32 %v704, %v733
          %735 = vdwg.mxu0
          %v736 = vld [vmem:[#allocation7] sm:$0xff]
          %v737 = vld [vmem:[#allocation7 + $0x8] sm:$0xff]
          %v738 = vld [vmem:[#allocation7 + $0x10] sm:$0xff]
          %v739 = vld [vmem:[#allocation7 + $0x18] sm:$0xff]
          %v740 = vld [vmem:[%s7] sm:$0x1]
          %v742 = vperm.slane %v740, 0
          %744 = vmatpush.msra.mxu0 0.0
          %745 = vmatpush.msra.mxu0 0.0
          %746 = vmatpush.msra.mxu0 0.0
          %747 = vmatpush.msra.mxu0 0.0
          %748 = vmatpush.msra.mxu0 0.0
          %749 = vmatpush.msra.mxu0 0.0
          %750 = vmatpush.msra.mxu0 0.0
          %751 = vmatpush.msra.mxu0 0.0
          %752 = vmatpush.msra.mxu0 0.0
          %753 = vmatpush.msra.mxu0 0.0
          %754 = vmatpush.msra.mxu0 0.0
          %755 = vmatpush.msra.mxu0 0.0
          %756 = vmatpush.msra.mxu0 %v739
          %757 = vmatpush.msra.mxu0 %v738
          %758 = vmatpush.msra.mxu0 %v737
          %759 = vmatpush.msra.mxu0 %v736
          %760 = vmatmul.f32.gmra.mxu0 %v708
          %v761 = vpop.f32.mrf.mxu0
          %v762 = vadd.f32 %v742, %v761
          %763 = vmatmul.f32.gmra.mxu0 %v711
          %v764 = vpop.f32.mrf.mxu0
          %v765 = vadd.f32 %v742, %v764
          %766 = vdwg.mxu0
          %767 = vst.msk [vmem:[#allocation2] sm:$0xff] %vm706, %v731
          %768 = vst.msk [vmem:[#allocation2 + $0x8] sm:$0xff] %vm706, %v734
          %769 = vst.msk [vmem:[#allocation3] sm:$0xff] %vm706, %v762
          %770 = vst.msk [vmem:[#allocation3 + $0x8] sm:$0xff] %vm706, %v765
        $region112: #{tpu_custom_call.1} parent=91 // pred_fallthru
          _
        %v771 = vld [vmem:[%s684] sm:$0xff]
        %v772 = vld [vmem:[%s684 + $0x8] sm:$0xff]
        %v773 = vld [vmem:[%s2] sm:$0xff]
        %v774 = vld [vmem:[%s2 + $0x8] sm:$0xff]
        %v775 = vld [vmem:[%s2 + $0x10] sm:$0xff]
        %v776 = vld [vmem:[%s2 + $0x18] sm:$0xff]
        %v777 = vld [vmem:[%s3] sm:$0x1]
        %v779 = vperm.slane %v777, 0
        %vm781 = vcmask 261120
        %v783 = vsel %vm781, %v771, 0
        %v786 = vsel %vm781, %v772, 0
        %788 = vmatpush.msra.mxu0 0.0
        %789 = vmatpush.msra.mxu0 0.0
        %790 = vmatpush.msra.mxu0 0.0
        %791 = vmatpush.msra.mxu0 0.0
        %792 = vmatpush.msra.mxu0 0.0
        %793 = vmatpush.msra.mxu0 0.0
        %794 = vmatpush.msra.mxu0 0.0
        %795 = vmatpush.msra.mxu0 0.0
        %796 = vmatpush.msra.mxu0 0.0
        %797 = vmatpush.msra.mxu0 0.0
        %798 = vmatpush.msra.mxu0 0.0
        %799 = vmatpush.msra.mxu0 0.0
        %800 = vmatpush.msra.mxu0 %v776
        %801 = vmatpush.msra.mxu0 %v775
        %802 = vmatpush.msra.mxu0 %v774
        %803 = vmatpush.msra.mxu0 %v773
        %804 = vmatmul.f32.gmra.mxu0 %v783
        %v805 = vpop.f32.mrf.mxu0
        %v806 = vadd.f32 %v779, %v805
        %807 = vmatmul.f32.gmra.mxu0 %v786
        %v808 = vpop.f32.mrf.mxu0
        %v809 = vadd.f32 %v779, %v808
        %810 = vdwg.mxu0
        %v811 = vmul.f32 %v806, 0.35355338
        %v812 = vmul.f32 %v809, 0.35355338
        %v813 = vld [vmem:[#allocation2] sm:$0xff]
        %v814 = vld [vmem:[#allocation2 + $0x8] sm:$0xff]
        %v815 = vld [vmem:[#allocation3] sm:$0xff]
        %v816 = vld [vmem:[#allocation3 + $0x8] sm:$0xff]
        %vm817 = vcmask 64512
        %v819 = vsel %vm817, %v811, 0
        %v822 = vsel %vm817, %v812, 0
        %v825 = vsel %vm817, %v813, 0
        %v828 = vsel %vm817, %v814, 0
        %830 = vmatpush.xpose.msra.mxu0 0.0
        %831 = vmatpush.xpose.msra.mxu0 0.0
        %832 = vmatpush.xpose.msra.mxu0 0.0
        %833 = vmatpush.xpose.msra.mxu0 0.0
        %834 = vmatpush.xpose.msra.mxu0 0.0
        %835 = vmatpush.xpose.msra.mxu0 0.0
        %836 = vmatpush.xpose.msra.mxu0 0.0
        %837 = vmatpush.xpose.msra.mxu0 0.0
        %838 = vmatpush.xpose.msra.mxu0 0.0
        %839 = vmatpush.xpose.msra.mxu0 0.0
        %840 = vmatpush.xpose.msra.mxu0 0.0
        %841 = vmatpush.xpose.msra.mxu0 0.0
        %842 = vmatpush.xpose.msra.mxu0 0.0
        %843 = vmatpush.xpose.msra.mxu0 0.0
        %844 = vmatpush.xpose.msra.mxu0 %v828
        %845 = vmatpush.xpose.msra.mxu0 %v825
        %846 = vmatmul.f32.gmra.mxu0 %v819
        %v847 = vpop.f32.mrf.mxu0
        %v848 = vadd.f32 0.0, %v847
        %849 = vmatmul.f32.gmra.mxu0 %v822
        %v850 = vpop.f32.mrf.mxu0
        %v851 = vadd.f32 0.0, %v850
        %852 = vdwg.mxu0
        %vm853 = vcmask 130048
        %v854 = vsel %vm853, %v848, -inf
        %855 = vmax.xlane.f32.xlu0 %v854
        %v856 = vpop.xlane.xlu0 %855
        %v857 = vsel %vm853, %v851, -inf
        %858 = vmax.xlane.f32.xlu0 %v857
        %v859 = vpop.xlane.xlu0 %858
        %v860 = vsub.f32 %v848, %v856
        %v861 = vsub.f32 %v851, %v859
        %v862 = vmul.f32 %v860, 1.442695
        %v863 = vpow.pop %v862
        %v864 = vmul.f32 %v861, 1.442695
        %v865 = vpow.pop %v864
        %v866 = vsel %vm853, %v863, 0.0
        %867 = vadd.xlane.f32.xlu0 %v866
        %v868 = vpop.xlane.xlu0 %867
        %v869 = vsel %vm853, %v865, 0.0
        %870 = vadd.xlane.f32.xlu0 %v869
        %v871 = vpop.xlane.xlu0 %870
        %v872 = vrcp.pop %v868
        %v873 = vrcp.pop %v871
        %v874 = vmul.f32 %v863, %v872
        %v875 = vmul.f32 %v865, %v873
        %v877 = vsel %vm853, %v874, 0
        %v880 = vsel %vm853, %v875, 0
        %882 = vmatpush.msra.mxu0 0.0
        %883 = vmatpush.msra.mxu0 0.0
        %884 = vmatpush.msra.mxu0 0.0
        %885 = vmatpush.msra.mxu0 0.0
        %886 = vmatpush.msra.mxu0 0.0
        %887 = vmatpush.msra.mxu0 0.0
        %888 = vmatpush.msra.mxu0 0.0
        %889 = vmatpush.msra.mxu0 0.0
        %890 = vmatpush.msra.mxu0 0.0
        %891 = vmatpush.msra.mxu0 0.0
        %892 = vmatpush.msra.mxu0 0.0
        %893 = vmatpush.msra.mxu0 0.0
        %894 = vmatpush.msra.mxu0 0.0
        %895 = vmatpush.msra.mxu0 0.0
        %896 = vmatpush.msra.mxu0 %v816
        %897 = vmatpush.msra.mxu0 %v815
        %898 = vmatmul.f32.gmra.mxu0 %v877
        %v899 = vpop.f32.mrf.mxu0
        %v900 = vadd.f32 0.0, %v899
        %901 = vmatmul.f32.gmra.mxu0 %v880
        %v902 = vpop.f32.mrf.mxu0
        %v903 = vadd.f32 0.0, %v902
        %904 = vdwg.mxu0
        %v905 = vld [vmem:[#allocation9] sm:$0xff]
        %906 = vrot.lane.b32.xlu0 %v811, 120
        %v907 = vpop.permute.xlu0 %906
        %908 = vrot.lane.b32.xlu0 %v812, 120
        %v909 = vpop.permute.xlu0 %908
        %910 = vrot.lane.b32.xlu0 %v813, 120
        %v911 = vpop.permute.xlu0 %910
        %912 = vrot.lane.b32.xlu0 %v814, 120
        %v913 = vpop.permute.xlu0 %912
        %v914 = vsel %vm817, %v907, 0
        %v916 = vsel %vm817, %v909, 0
        %v918 = vsel %vm817, %v911, 0
        %v920 = vsel %vm817, %v913, 0
        %922 = vmatpush.xpose.msra.mxu0 0.0
        %923 = vmatpush.xpose.msra.mxu0 0.0
        %924 = vmatpush.xpose.msra.mxu0 0.0
        %925 = vmatpush.xpose.msra.mxu0 0.0
        %926 = vmatpush.xpose.msra.mxu0 0.0
        %927 = vmatpush.xpose.msra.mxu0 0.0
        %928 = vmatpush.xpose.msra.mxu0 0.0
        %929 = vmatpush.xpose.msra.mxu0 0.0
        %930 = vmatpush.xpose.msra.mxu0 0.0
        %931 = vmatpush.xpose.msra.mxu0 0.0
        %932 = vmatpush.xpose.msra.mxu0 0.0
        %933 = vmatpush.xpose.msra.mxu0 0.0
        %934 = vmatpush.xpose.msra.mxu0 0.0
        %935 = vmatpush.xpose.msra.mxu0 0.0
        %936 = vmatpush.xpose.msra.mxu0 %v920
        %937 = vmatpush.xpose.msra.mxu0 %v918
        %938 = vmatmul.f32.gmra.mxu0 %v914
        %v939 = vpop.f32.mrf.mxu0
        %v940 = vadd.f32 0.0, %v939
        %941 = vmatmul.f32.gmra.mxu0 %v916
        %v942 = vpop.f32.mrf.mxu0
        %v943 = vadd.f32 0.0, %v942
        %944 = vdwg.mxu0
        %v945 = vsel %vm853, %v940, -inf
        %946 = vmax.xlane.f32.xlu0 %v945
        %v947 = vpop.xlane.xlu0 %946
        %v948 = vsel %vm853, %v943, -inf
        %949 = vmax.xlane.f32.xlu0 %v948
        %v950 = vpop.xlane.xlu0 %949
        %v951 = vsub.f32 %v940, %v947
        %v952 = vsub.f32 %v943, %v950
        %v953 = vmul.f32 %v951, 1.442695
        %v954 = vpow.pop %v953
        %v955 = vmul.f32 %v952, 1.442695
        %v956 = vpow.pop %v955
        %v957 = vsel %vm853, %v954, 0.0
        %958 = vadd.xlane.f32.xlu0 %v957
        %v959 = vpop.xlane.xlu0 %958
        %v960 = vsel %vm853, %v956, 0.0
        %961 = vadd.xlane.f32.xlu0 %v960
        %v962 = vpop.xlane.xlu0 %961
        %v963 = vrcp.pop %v959
        %v964 = vrcp.pop %v962
        %v965 = vmul.f32 %v954, %v963
        %v966 = vmul.f32 %v956, %v964
        %969 = vrot.lane.b32.xlu0 %v815, 120
        %v970 = vpop.permute.xlu0 %969
        %971 = vrot.lane.b32.xlu0 %v816, 120
        %v972 = vpop.permute.xlu0 %971
        %v976 = vsel %vm853, %v965, 0
        %v979 = vsel %vm853, %v966, 0
        %981 = vmatpush.msra.mxu0 0.0
        %982 = vmatpush.msra.mxu0 0.0
        %983 = vmatpush.msra.mxu0 0.0
        %984 = vmatpush.msra.mxu0 0.0
        %985 = vmatpush.msra.mxu0 0.0
        %986 = vmatpush.msra.mxu0 0.0
        %987 = vmatpush.msra.mxu0 0.0
        %988 = vmatpush.msra.mxu0 0.0
        %989 = vmatpush.msra.mxu0 0.0
        %990 = vmatpush.msra.mxu0 0.0
        %991 = vmatpush.msra.mxu0 0.0
        %992 = vmatpush.msra.mxu0 0.0
        %993 = vmatpush.msra.mxu0 0.0
        %994 = vmatpush.msra.mxu0 0.0
        %995 = vmatpush.msra.mxu0 %v972
        %996 = vmatpush.msra.mxu0 %v970
        %997 = vmatmul.f32.gmra.mxu0 %v976
        %v998 = vpop.f32.mrf.mxu0
        %v999 = vadd.f32 0.0, %v998
        %1000 = vmatmul.f32.gmra.mxu0 %v979
        %v1001 = vpop.f32.mrf.mxu0
        %v1002 = vadd.f32 0.0, %v1001
        %1003 = vdwg.mxu0
        %v1004 = vld [vmem:[#allocation9 + $0x8] sm:$0xff]
        %v1006 = vsel %vm817, %v999, 0
        %v1009 = vsel %vm817, %v1002, 0
        %1011 = vmatpush.msra.mxu0 0.0
        %1012 = vmatpush.msra.mxu0 0.0
        %1013 = vmatpush.msra.mxu0 0.0
        %1014 = vmatpush.msra.mxu0 0.0
        %1015 = vmatpush.msra.mxu0 0.0
        %1016 = vmatpush.msra.mxu0 0.0
        %1017 = vmatpush.msra.mxu0 0.0
        %1018 = vmatpush.msra.mxu0 0.0
        %1019 = vmatpush.msra.mxu0 0.0
        %1020 = vmatpush.msra.mxu0 0.0
        %1021 = vmatpush.msra.mxu0 0.0
        %1022 = vmatpush.msra.mxu0 0.0
        %1023 = vmatpush.msra.mxu0 0.0
        %1024 = vmatpush.msra.mxu0 0.0
        %1025 = vmatpush.msra.mxu0 0.0
        %1026 = vmatpush.msra.mxu0 %v1004
        %1027 = vmatmul.f32.gmra.mxu0 %v1006
        %v1028 = vpop.f32.mrf.mxu0
        %v1029 = vadd.f32 0.0, %v1028
        %1030 = vmatmul.f32.gmra.mxu0 %v1009
        %v1031 = vpop.f32.mrf.mxu0
        %v1032 = vadd.f32 0.0, %v1031
        %1033 = vdwg.mxu0
        %v1035 = vsel %vm817, %v900, 0
        %v1038 = vsel %vm817, %v903, 0
        %1040 = vmatpush.msra.mxu0 0.0
        %1041 = vmatpush.msra.mxu0 0.0
        %1042 = vmatpush.msra.mxu0 0.0
        %1043 = vmatpush.msra.mxu0 0.0
        %1044 = vmatpush.msra.mxu0 0.0
        %1045 = vmatpush.msra.mxu0 0.0
        %1046 = vmatpush.msra.mxu0 0.0
        %1047 = vmatpush.msra.mxu0 0.0
        %1048 = vmatpush.msra.mxu0 0.0
        %1049 = vmatpush.msra.mxu0 0.0
        %1050 = vmatpush.msra.mxu0 0.0
        %1051 = vmatpush.msra.mxu0 0.0
        %1052 = vmatpush.msra.mxu0 0.0
        %1053 = vmatpush.msra.mxu0 0.0
        %1054 = vmatpush.msra.mxu0 0.0
        %1055 = vmatpush.msra.mxu0 %v905
        %1056 = vmatmul.f32.gmra.mxu0 %v1035
        %v1057 = vpop.f32.mrf.mxu0
        %v1058 = vadd.f32 %v1029, %v1057
        %1059 = vmatmul.f32.gmra.mxu0 %v1038
        %v1060 = vpop.f32.mrf.mxu0
        %v1061 = vadd.f32 %v1032, %v1060
        %1062 = vdwg.mxu0
        %1063 = vrot.lane.b32.xlu0 %v811, 112
        %v1064 = vpop.permute.xlu0 %1063
        %1065 = vrot.lane.b32.xlu0 %v812, 112
        %v1066 = vpop.permute.xlu0 %1065
        %1067 = vrot.lane.b32.xlu0 %v813, 112
        %v1068 = vpop.permute.xlu0 %1067
        %1069 = vrot.lane.b32.xlu0 %v814, 112
        %v1070 = vpop.permute.xlu0 %1069
        %v1071 = vsel %vm817, %v1064, 0
        %v1073 = vsel %vm817, %v1066, 0
        %v1075 = vsel %vm817, %v1068, 0
        %v1077 = vsel %vm817, %v1070, 0
        %1079 = vmatpush.xpose.msra.mxu0 0.0
        %1080 = vmatpush.xpose.msra.mxu0 0.0
        %1081 = vmatpush.xpose.msra.mxu0 0.0
        %1082 = vmatpush.xpose.msra.mxu0 0.0
        %1083 = vmatpush.xpose.msra.mxu0 0.0
        %1084 = vmatpush.xpose.msra.mxu0 0.0
        %1085 = vmatpush.xpose.msra.mxu0 0.0
        %1086 = vmatpush.xpose.msra.mxu0 0.0
        %1087 = vmatpush.xpose.msra.mxu0 0.0
        %1088 = vmatpush.xpose.msra.mxu0 0.0
        %1089 = vmatpush.xpose.msra.mxu0 0.0
        %1090 = vmatpush.xpose.msra.mxu0 0.0
        %1091 = vmatpush.xpose.msra.mxu0 0.0
        %1092 = vmatpush.xpose.msra.mxu0 0.0
        %1093 = vmatpush.xpose.msra.mxu0 %v1077
        %1094 = vmatpush.xpose.msra.mxu0 %v1075
        %1095 = vmatmul.f32.gmra.mxu0 %v1071
        %v1096 = vpop.f32.mrf.mxu0
        %v1097 = vadd.f32 0.0, %v1096
        %1098 = vmatmul.f32.gmra.mxu0 %v1073
        %v1099 = vpop.f32.mrf.mxu0
        %v1100 = vadd.f32 0.0, %v1099
        %1101 = vdwg.mxu0
        %v1102 = vsel %vm853, %v1097, -inf
        %1103 = vmax.xlane.f32.xlu0 %v1102
        %v1104 = vpop.xlane.xlu0 %1103
        %v1105 = vsel %vm853, %v1100, -inf
        %1106 = vmax.xlane.f32.xlu0 %v1105
        %v1107 = vpop.xlane.xlu0 %1106
        %v1108 = vsub.f32 %v1097, %v1104
        %v1109 = vsub.f32 %v1100, %v1107
        %v1110 = vmul.f32 %v1108, 1.442695
        %v1111 = vpow.pop %v1110
        %v1112 = vmul.f32 %v1109, 1.442695
        %v1113 = vpow.pop %v1112
        %v1114 = vsel %vm853, %v1111, 0.0
        %1115 = vadd.xlane.f32.xlu0 %v1114
        %v1116 = vpop.xlane.xlu0 %1115
        %v1117 = vsel %vm853, %v1113, 0.0
        %1118 = vadd.xlane.f32.xlu0 %v1117
        %v1119 = vpop.xlane.xlu0 %1118
        %v1120 = vrcp.pop %v1116
        %v1121 = vrcp.pop %v1119
        %v1122 = vmul.f32 %v1111, %v1120
        %v1123 = vmul.f32 %v1113, %v1121
        %1124 = vrot.lane.b32.xlu0 %v815, 112
        %v1125 = vpop.permute.xlu0 %1124
        %1126 = vrot.lane.b32.xlu0 %v816, 112
        %v1127 = vpop.permute.xlu0 %1126
        %v1131 = vsel %vm853, %v1122, 0
        %v1134 = vsel %vm853, %v1123, 0
        %1136 = vmatpush.msra.mxu0 0.0
        %1137 = vmatpush.msra.mxu0 0.0
        %1138 = vmatpush.msra.mxu0 0.0
        %1139 = vmatpush.msra.mxu0 0.0
        %1140 = vmatpush.msra.mxu0 0.0
        %1141 = vmatpush.msra.mxu0 0.0
        %1142 = vmatpush.msra.mxu0 0.0
        %1143 = vmatpush.msra.mxu0 0.0
        %1144 = vmatpush.msra.mxu0 0.0
        %1145 = vmatpush.msra.mxu0 0.0
        %1146 = vmatpush.msra.mxu0 0.0
        %1147 = vmatpush.msra.mxu0 0.0
        %1148 = vmatpush.msra.mxu0 0.0
        %1149 = vmatpush.msra.mxu0 0.0
        %1150 = vmatpush.msra.mxu0 %v1127
        %1151 = vmatpush.msra.mxu0 %v1125
        %1152 = vmatmul.f32.gmra.mxu0 %v1131
        %v1153 = vpop.f32.mrf.mxu0
        %v1154 = vadd.f32 0.0, %v1153
        %1155 = vmatmul.f32.gmra.mxu0 %v1134
        %v1156 = vpop.f32.mrf.mxu0
        %v1157 = vadd.f32 0.0, %v1156
        %1158 = vdwg.mxu0
        %v1159 = vld [vmem:[#allocation9 + $0x10] sm:$0xff]
        %v1161 = vsel %vm817, %v1154, 0
        %v1164 = vsel %vm817, %v1157, 0
        %1166 = vmatpush.msra.mxu0 0.0
        %1167 = vmatpush.msra.mxu0 0.0
        %1168 = vmatpush.msra.mxu0 0.0
        %1169 = vmatpush.msra.mxu0 0.0
        %1170 = vmatpush.msra.mxu0 0.0
        %1171 = vmatpush.msra.mxu0 0.0
        %1172 = vmatpush.msra.mxu0 0.0
        %1173 = vmatpush.msra.mxu0 0.0
        %1174 = vmatpush.msra.mxu0 0.0
        %1175 = vmatpush.msra.mxu0 0.0
        %1176 = vmatpush.msra.mxu0 0.0
        %1177 = vmatpush.msra.mxu0 0.0
        %1178 = vmatpush.msra.mxu0 0.0
        %1179 = vmatpush.msra.mxu0 0.0
        %1180 = vmatpush.msra.mxu0 0.0
        %1181 = vmatpush.msra.mxu0 %v1159
        %1182 = vmatmul.f32.gmra.mxu0 %v1161
        %v1183 = vpop.f32.mrf.mxu0
        %v1184 = vadd.f32 0.0, %v1183
        %1185 = vmatmul.f32.gmra.mxu0 %v1164
        %v1186 = vpop.f32.mrf.mxu0
        %v1187 = vadd.f32 0.0, %v1186
        %1188 = vdwg.mxu0
        %v1189 = vadd.f32 %v1058, %v1184
        %v1190 = vadd.f32 %v1061, %v1187
        %1191 = vrot.lane.b32.xlu0 %v811, 104
        %v1192 = vpop.permute.xlu0 %1191
        %1193 = vrot.lane.b32.xlu0 %v812, 104
        %v1194 = vpop.permute.xlu0 %1193
        %1195 = vrot.lane.b32.xlu0 %v813, 104
        %v1196 = vpop.permute.xlu0 %1195
        %1197 = vrot.lane.b32.xlu0 %v814, 104
        %v1198 = vpop.permute.xlu0 %1197
        %v1199 = vsel %vm817, %v1192, 0
        %v1201 = vsel %vm817, %v1194, 0
        %v1203 = vsel %vm817, %v1196, 0
        %v1205 = vsel %vm817, %v1198, 0
        %1207 = vmatpush.xpose.msra.mxu0 0.0
        %1208 = vmatpush.xpose.msra.mxu0 0.0
        %1209 = vmatpush.xpose.msra.mxu0 0.0
        %1210 = vmatpush.xpose.msra.mxu0 0.0
        %1211 = vmatpush.xpose.msra.mxu0 0.0
        %1212 = vmatpush.xpose.msra.mxu0 0.0
        %1213 = vmatpush.xpose.msra.mxu0 0.0
        %1214 = vmatpush.xpose.msra.mxu0 0.0
        %1215 = vmatpush.xpose.msra.mxu0 0.0
        %1216 = vmatpush.xpose.msra.mxu0 0.0
        %1217 = vmatpush.xpose.msra.mxu0 0.0
        %1218 = vmatpush.xpose.msra.mxu0 0.0
        %1219 = vmatpush.xpose.msra.mxu0 0.0
        %1220 = vmatpush.xpose.msra.mxu0 0.0
        %1221 = vmatpush.xpose.msra.mxu0 %v1205
        %1222 = vmatpush.xpose.msra.mxu0 %v1203
        %1223 = vmatmul.f32.gmra.mxu0 %v1199
        %v1224 = vpop.f32.mrf.mxu0
        %v1225 = vadd.f32 0.0, %v1224
        %1226 = vmatmul.f32.gmra.mxu0 %v1201
        %v1227 = vpop.f32.mrf.mxu0
        %v1228 = vadd.f32 0.0, %v1227
        %1229 = vdwg.mxu0
        %v1230 = vsel %vm853, %v1225, -inf
        %1231 = vmax.xlane.f32.xlu0 %v1230
        %v1232 = vpop.xlane.xlu0 %1231
        %v1233 = vsel %vm853, %v1228, -inf
        %1234 = vmax.xlane.f32.xlu0 %v1233
        %v1235 = vpop.xlane.xlu0 %1234
        %v1236 = vsub.f32 %v1225, %v1232
        %v1237 = vsub.f32 %v1228, %v1235
        %v1238 = vmul.f32 %v1236, 1.442695
        %v1239 = vpow.pop %v1238
        %v1240 = vmul.f32 %v1237, 1.442695
        %v1241 = vpow.pop %v1240
        %v1242 = vsel %vm853, %v1239, 0.0
        %1243 = vadd.xlane.f32.xlu0 %v1242
        %v1244 = vpop.xlane.xlu0 %1243
        %v1245 = vsel %vm853, %v1241, 0.0
        %1246 = vadd.xlane.f32.xlu0 %v1245
        %v1247 = vpop.xlane.xlu0 %1246
        %v1248 = vrcp.pop %v1244
        %v1249 = vrcp.pop %v1247
        %v1250 = vmul.f32 %v1239, %v1248
        %v1251 = vmul.f32 %v1241, %v1249
        %1252 = vrot.lane.b32.xlu0 %v815, 104
        %v1253 = vpop.permute.xlu0 %1252
        %1254 = vrot.lane.b32.xlu0 %v816, 104
        %v1255 = vpop.permute.xlu0 %1254
        %v1259 = vsel %vm853, %v1250, 0
        %v1262 = vsel %vm853, %v1251, 0
        %1264 = vmatpush.msra.mxu0 0.0
        %1265 = vmatpush.msra.mxu0 0.0
        %1266 = vmatpush.msra.mxu0 0.0
        %1267 = vmatpush.msra.mxu0 0.0
        %1268 = vmatpush.msra.mxu0 0.0
        %1269 = vmatpush.msra.mxu0 0.0
        %1270 = vmatpush.msra.mxu0 0.0
        %1271 = vmatpush.msra.mxu0 0.0
        %1272 = vmatpush.msra.mxu0 0.0
        %1273 = vmatpush.msra.mxu0 0.0
        %1274 = vmatpush.msra.mxu0 0.0
        %1275 = vmatpush.msra.mxu0 0.0
        %1276 = vmatpush.msra.mxu0 0.0
        %1277 = vmatpush.msra.mxu0 0.0
        %1278 = vmatpush.msra.mxu0 %v1255
        %1279 = vmatpush.msra.mxu0 %v1253
        %1280 = vmatmul.f32.gmra.mxu0 %v1259
        %v1281 = vpop.f32.mrf.mxu0
        %v1282 = vadd.f32 0.0, %v1281
        %1283 = vmatmul.f32.gmra.mxu0 %v1262
        %v1284 = vpop.f32.mrf.mxu0
        %v1285 = vadd.f32 0.0, %v1284
        %1286 = vdwg.mxu0
        %v1287 = vld [vmem:[#allocation9 + $0x18] sm:$0xff]
        %v1289 = vsel %vm817, %v1282, 0
        %v1292 = vsel %vm817, %v1285, 0
        %1294 = vmatpush.msra.mxu0 0.0
        %1295 = vmatpush.msra.mxu0 0.0
        %1296 = vmatpush.msra.mxu0 0.0
        %1297 = vmatpush.msra.mxu0 0.0
        %1298 = vmatpush.msra.mxu0 0.0
        %1299 = vmatpush.msra.mxu0 0.0
        %1300 = vmatpush.msra.mxu0 0.0
        %1301 = vmatpush.msra.mxu0 0.0
        %1302 = vmatpush.msra.mxu0 0.0
        %1303 = vmatpush.msra.mxu0 0.0
        %1304 = vmatpush.msra.mxu0 0.0
        %1305 = vmatpush.msra.mxu0 0.0
        %1306 = vmatpush.msra.mxu0 0.0
        %1307 = vmatpush.msra.mxu0 0.0
        %1308 = vmatpush.msra.mxu0 0.0
        %1309 = vmatpush.msra.mxu0 %v1287
        %1310 = vmatmul.f32.gmra.mxu0 %v1289
        %v1311 = vpop.f32.mrf.mxu0
        %v1312 = vadd.f32 0.0, %v1311
        %1313 = vmatmul.f32.gmra.mxu0 %v1292
        %v1314 = vpop.f32.mrf.mxu0
        %v1315 = vadd.f32 0.0, %v1314
        %1316 = vdwg.mxu0
        %v1317 = vadd.f32 %v1189, %v1312
        %v1318 = vadd.f32 %v1190, %v1315
        %v1319 = vld [vmem:[%s9] sm:$0x1]
        %v1321 = vperm.slane %v1319, 0
        %v1323 = vadd.f32 %v1317, %v1321
        %v1324 = vadd.f32 %v1318, %v1321
        %v1325 = vadd.f32 %v771, %v1323
        %v1326 = vadd.f32 %v772, %v1324
        %v1327 = vld [vmem:[%s10] sm:$0x1]
        %v1328 = vld [vmem:[%s11] sm:$0x1]
        %v1329 = vsel %vm781, %v1325, 0.0
        %1330 = vadd.xlane.f32.xlu0 %v1329
        %v1331 = vpop.xlane.xlu0 %1330
        %v1332 = vsel %vm781, %v1326, 0.0
        %1333 = vadd.xlane.f32.xlu0 %v1332
        %v1334 = vpop.xlane.xlu0 %1333
        %v1335 = vrcp.pop 32.0
        %v1336 = vmul.f32 32.0, %v1335
        %v1337 = vsub.f32 1.0, %v1336
        %v1338 = vmul.f32 %v1335, %v1337
        %v1339 = vadd.f32 %v1335, %v1338
        %vm1340 = vweird.f32 %v1335
        %v1341 = vsel %vm1340, %v1335, %v1339
        %v1342 = vmul.f32 %v1331, %v1341
        %v1343 = vmul.f32 %v1334, %v1341
        %v1344 = vsub.f32 %v1325, %v1342
        %v1345 = vsub.f32 %v1326, %v1343
        %v1346 = vmul.f32 %v1344, %v1344
        %v1347 = vmul.f32 %v1345, %v1345
        %v1348 = vsel %vm781, %v1346, 0.0
        %1349 = vadd.xlane.f32.xlu0 %v1348
        %v1350 = vpop.xlane.xlu0 %1349
        %v1351 = vsel %vm781, %v1347, 0.0
        %1352 = vadd.xlane.f32.xlu0 %v1351
        %v1353 = vpop.xlane.xlu0 %1352
        %v1354 = vmul.f32 %v1350, %v1341
        %v1355 = vmul.f32 %v1353, %v1341
        %v1356 = vadd.f32 %v1354, 1e-05
        %v1357 = vadd.f32 %v1355, 1e-05
        %v1358 = vrsqrt.pop %v1356
        %v1359 = vmul.f32 %v1358, %v1356
        %v1360 = vmul.f32 %v1359, %v1358
        %v1361 = vmul.f32 0.5, %v1360
        %v1362 = vsub.f32 1.5, %v1361
        %v1363 = vmul.f32 %v1358, %v1362
        %vm1364 = vweird.f32 %v1356
        %vm1365 = vweird.f32 %v1358
        %vm1366 = vmor %vm1364, %vm1365
        %v1367 = vsel %vm1366, %v1358, %v1363
        %v1368 = vrsqrt.pop %v1357
        %v1369 = vmul.f32 %v1368, %v1357
        %v1370 = vmul.f32 %v1369, %v1368
        %v1371 = vmul.f32 0.5, %v1370
        %v1372 = vsub.f32 1.5, %v1371
        %v1373 = vmul.f32 %v1368, %v1372
        %vm1374 = vweird.f32 %v1357
        %vm1375 = vweird.f32 %v1368
        %vm1376 = vmor %vm1374, %vm1375
        %v1377 = vsel %vm1376, %v1368, %v1373
        %v1378 = vmul.f32 %v1344, %v1367
        %v1379 = vmul.f32 %v1345, %v1377
        %v1381 = vperm.slane %v1327, 0
        %v1383 = vmul.f32 %v1378, %v1381
        %v1384 = vmul.f32 %v1379, %v1381
        %v1386 = vperm.slane %v1328, 0
        %v1388 = vadd.f32 %v1383, %v1386
        %v1389 = vadd.f32 %v1384, %v1386
        %v1390 = vld [vmem:[#allocation10] sm:$0xff]
        %v1391 = vld [vmem:[#allocation10 + $0x8] sm:$0xff]
        %v1392 = vld [vmem:[#allocation10 + $0x10] sm:$0xff]
        %v1393 = vld [vmem:[#allocation10 + $0x18] sm:$0xff]
        %v1394 = vld [vmem:[%s13] sm:$0x1]
        %v1396 = vperm.slane %v1394, 0
        %v1399 = vsel %vm781, %v1388, 0
        %v1402 = vsel %vm781, %v1389, 0
        %1404 = vmatpush.msra.mxu0 0.0
        %1405 = vmatpush.msra.mxu0 0.0
        %1406 = vmatpush.msra.mxu0 0.0
        %1407 = vmatpush.msra.mxu0 0.0
        %1408 = vmatpush.msra.mxu0 0.0
        %1409 = vmatpush.msra.mxu0 0.0
        %1410 = vmatpush.msra.mxu0 0.0
        %1411 = vmatpush.msra.mxu0 0.0
        %1412 = vmatpush.msra.mxu0 0.0
        %1413 = vmatpush.msra.mxu0 0.0
        %1414 = vmatpush.msra.mxu0 0.0
        %1415 = vmatpush.msra.mxu0 0.0
        %1416 = vmatpush.msra.mxu0 %v1393
        %1417 = vmatpush.msra.mxu0 %v1392
        %1418 = vmatpush.msra.mxu0 %v1391
        %1419 = vmatpush.msra.mxu0 %v1390
        %1420 = vmatmul.f32.gmra.mxu0 %v1399
        %v1421 = vpop.f32.mrf.mxu0
        %v1422 = vadd.f32 %v1396, %v1421
        %1423 = vmatmul.f32.gmra.mxu0 %v1402
        %v1424 = vpop.f32.mrf.mxu0
        %v1425 = vadd.f32 %v1396, %v1424
        %1426 = vdwg.mxu0
        %v1427 = vmax.f32 %v1422, 0.0
        %v1428 = vmax.f32 %v1425, 0.0
        %v1429 = vld [vmem:[%s14] sm:$0xff]
        %v1430 = vld [vmem:[%s14 + $0x8] sm:$0xff]
        %v1431 = vld [vmem:[%s14 + $0x10] sm:$0xff]
        %v1432 = vld [vmem:[%s14 + $0x18] sm:$0xff]
        %v1433 = vld [vmem:[%s14 + $0x20] sm:$0xff]
        %v1434 = vld [vmem:[%s14 + $0x28] sm:$0xff]
        %v1435 = vld [vmem:[%s14 + $0x30] sm:$0xff]
        %v1436 = vld [vmem:[%s14 + $0x38] sm:$0xff]
        %v1437 = vld [vmem:[%s15] sm:$0x1]
        %v1439 = vperm.slane %v1437, 0
        %vm1441 = vcmask 523264
        %v1443 = vsel %vm1441, %v1427, 0
        %v1446 = vsel %vm1441, %v1428, 0
        %1448 = vmatpush.msra.mxu0 0.0
        %1449 = vmatpush.msra.mxu0 0.0
        %1450 = vmatpush.msra.mxu0 0.0
        %1451 = vmatpush.msra.mxu0 0.0
        %1452 = vmatpush.msra.mxu0 0.0
        %1453 = vmatpush.msra.mxu0 0.0
        %1454 = vmatpush.msra.mxu0 0.0
        %1455 = vmatpush.msra.mxu0 0.0
        %1456 = vmatpush.msra.mxu0 %v1436
        %1457 = vmatpush.msra.mxu0 %v1435
        %1458 = vmatpush.msra.mxu0 %v1434
        %1459 = vmatpush.msra.mxu0 %v1433
        %1460 = vmatpush.msra.mxu0 %v1432
        %1461 = vmatpush.msra.mxu0 %v1431
        %1462 = vmatpush.msra.mxu0 %v1430
        %1463 = vmatpush.msra.mxu0 %v1429
        %1464 = vmatmul.f32.gmra.mxu0 %v1443
        %v1465 = vpop.f32.mrf.mxu0
        %v1466 = vadd.f32 %v1439, %v1465
        %1467 = vmatmul.f32.gmra.mxu0 %v1446
        %v1468 = vpop.f32.mrf.mxu0
        %v1469 = vadd.f32 %v1439, %v1468
        %1470 = vdwg.mxu0
        %v1471 = vadd.f32 %v1388, %v1466
        %v1472 = vadd.f32 %v1389, %v1469
        %v1473 = vld [vmem:[%s16] sm:$0x1]
        %v1474 = vld [vmem:[%s17] sm:$0x1]
        %v1475 = vsel %vm781, %v1471, 0.0
        %1476 = vadd.xlane.f32.xlu0 %v1475
        %v1477 = vpop.xlane.xlu0 %1476
        %v1478 = vsel %vm781, %v1472, 0.0
        %1479 = vadd.xlane.f32.xlu0 %v1478
        %v1480 = vpop.xlane.xlu0 %1479
        %v1481 = vmul.f32 %v1477, %v1341
        %v1482 = vmul.f32 %v1480, %v1341
        %v1483 = vsub.f32 %v1471, %v1481
        %v1484 = vsub.f32 %v1472, %v1482
        %v1485 = vmul.f32 %v1483, %v1483
        %v1486 = vmul.f32 %v1484, %v1484
        %v1487 = vsel %vm781, %v1485, 0.0
        %1488 = vadd.xlane.f32.xlu0 %v1487
        %v1489 = vpop.xlane.xlu0 %1488
        %v1490 = vsel %vm781, %v1486, 0.0
        %1491 = vadd.xlane.f32.xlu0 %v1490
        %v1492 = vpop.xlane.xlu0 %1491
        %v1493 = vmul.f32 %v1489, %v1341
        %v1494 = vmul.f32 %v1492, %v1341
        %v1495 = vadd.f32 %v1493, 1e-05
        %v1496 = vadd.f32 %v1494, 1e-05
        %v1497 = vrsqrt.pop %v1495
        %v1498 = vmul.f32 %v1497, %v1495
        %v1499 = vmul.f32 %v1498, %v1497
        %v1500 = vmul.f32 0.5, %v1499
        %v1501 = vsub.f32 1.5, %v1500
        %v1502 = vmul.f32 %v1497, %v1501
        %vm1503 = vweird.f32 %v1495
        %vm1504 = vweird.f32 %v1497
        %vm1505 = vmor %vm1503, %vm1504
        %v1506 = vsel %vm1505, %v1497, %v1502
        %v1507 = vrsqrt.pop %v1496
        %v1508 = vmul.f32 %v1507, %v1496
        %v1509 = vmul.f32 %v1508, %v1507
        %v1510 = vmul.f32 0.5, %v1509
        %v1511 = vsub.f32 1.5, %v1510
        %v1512 = vmul.f32 %v1507, %v1511
        %vm1513 = vweird.f32 %v1496
        %vm1514 = vweird.f32 %v1507
        %vm1515 = vmor %vm1513, %vm1514
        %v1516 = vsel %vm1515, %v1507, %v1512
        %v1517 = vmul.f32 %v1483, %v1506
        %v1518 = vmul.f32 %v1484, %v1516
        %v1520 = vperm.slane %v1473, 0
        %v1522 = vmul.f32 %v1517, %v1520
        %v1523 = vmul.f32 %v1518, %v1520
        %v1525 = vperm.slane %v1474, 0
        %v1527 = vadd.f32 %v1522, %v1525
        %v1528 = vadd.f32 %v1523, %v1525
        %1529 = vst.msk [vmem:[%s675] sm:$0xff] %vm781, %v1527
        %1530 = vst.msk [vmem:[%s675 + $0x8] sm:$0xff] %vm781, %v1528
        %s1531 = sand.u32 %s447, 1
        %s1532 = scalar_lea.sflag [#allocation6], %s1531
        %s1533 = sand.u32 %s447, 1
        %s1534 = smul.addr %s1533, 16
        %s1535 = scalar_lea.vmem [#allocation12], %s1534
        // Predicated region
        $region113: #{tpu_custom_call.1} parent=91 // pred_check
          %p1536 = pneg %p457
        $region114: #{tpu_custom_call.1} parent=91 // pred_check_branch
          %1538 = sbr.rel (%p1536) target = $region116
        $region115: #{tpu_custom_call.1} parent=91 // pred_region
          %s1539 = smul.u32 2, %s40
          %1541 = vsyncadd %s1532, 0
          %s1542 = smul.addr %s39, 2
          %s1543 = sadd.s32 %s1539, %s1542
          %s1544 = smul.addr %s1543, 8
          %s1545 = scalar_lea.hbm %s18, %s1544
          %s1546 = sshll.u32 %s1535, 4
          %s1547 = int_to_ptr.vmem [resolvable:$true] %s1546
          %s1548 = sshll.u32 %s1545, 4
          %s1549 = int_to_ptr.hbm [resolvable:$true] %s1548
          %1554 = dma.vmem_to_hbm [thread:$0]  %s1547, 256, %s1549, %s1532, 128, 128, 8
        $region116: #{tpu_custom_call.1} parent=91 // pred_fallthru
          _
      $region92: #{tpu_custom_call.1} parent=5 // pred_fallthru
        _
      %p1555 = scmp.le.s32.totalorder 2, %s30
      // Predicated region
      $region117: #{tpu_custom_call.1} parent=5 // pred_check
        %p1556 = pneg %p1555
      $region118: #{tpu_custom_call.1} parent=5 // pred_check_branch
        %1558 = sbr.rel (%p1556) target = $region120
      $region119: #{tpu_custom_call.1} parent=5 // pred_region
        %s1559 = ssub.s32 %s30, 2
        // Predicated region
        $region121: #{tpu_custom_call.1} parent=119 // pred_check
          %p1560 = pneg %p463
        $region122: #{tpu_custom_call.1} parent=119 // pred_check_branch
          %1562 = sbr.rel (%p1560) target = $region124
        $region123: #{tpu_custom_call.1} parent=119 // pred_region
          %s1563 = sand.u32 %s448, 1
          %s1564 = scalar_lea.sflag [#allocation6], %s1563
          %s1565 = sand.u32 %s448, 1
          %s1566 = smul.addr %s1565, 16
          %s1567 = scalar_lea.vmem [#allocation12], %s1566
          %1569 = dma.done %s1564, 256
        $region124: #{tpu_custom_call.1} parent=119 // pred_fallthru
          _
      $region120: #{tpu_custom_call.1} parent=5 // pred_fallthru
        _
    $region6: #{tpu_custom_call.1} parent=1 // loop_footer
      %s34 = sadd.s32 1, %s30
    $region7: #{tpu_custom_call.1} parent=1 // loop_footer_branch
      %29 = sbr.rel target = $region3
    $region8: #{tpu_custom_call.1} parent=1 // loop_exit
      _
    %1570 = vsyncpa [#allocation5], 1
    %s1571 = scalar_lea.sflag [#allocation5], 1
    %1572 = vsyncpa %s1571, 1
    %1573 = vsyncpa [#allocation8], 1
    %1574 = vsyncpa [#allocation11], 1
    %1575 = vsyncpa [#allocation6], 1
    %s1576 = scalar_lea.sflag [#allocation6], 1
    %1577 = vsyncpa %s1576, 1

</llo_original>
